<compile_context>
chip_gen: v6e
topology: v6e:2x2x1
jax: 0.10.0
libtpu: 0.0.40
codegen_flags: <defaults>
</compile_context>

<pallas_src>
import functools

import jax
import jax.numpy as jnp
from jax.experimental import pallas as pl
from jax.experimental.pallas import tpu as pltpu


def _decoder_kernel(z_ref, b1row_ref, lib_ref,
                    w1z_ref, wout_ref, bout_ref,
                    scale_ref, r_ref, rate_ref, drop_ref,
                    *, n_out_p, matmul_dtype):
    # ---- FCLayers layer 0: Linear([z, one_hot(cat)]) + ReLU ----
    # The one-hot covariate contribution and the bias are pre-folded into
    # b1row (per-row) in the wrapper, so this is a single MXU matmul + add.
    h = jnp.dot(z_ref[...], w1z_ref[...], preferred_element_type=jnp.float32)
    px = jnp.maximum(h + b1row_ref[...], 0.0)                 # (TB, n_hidden) f32

    # ---- fused output projection: [W_scale | W_r | W_dropout] along N ----
    out = jnp.dot(px.astype(matmul_dtype), wout_ref[...],
                  preferred_element_type=jnp.float32)
    out = out + bout_ref[...]                                 # (TB, 3*n_out_p) f32

    # n_out_p is a multiple of 128 -> lane-aligned, copy-free slices.
    logits = out[:, :n_out_p]
    px_r = out[:, n_out_p:2 * n_out_p]
    px_drop = out[:, 2 * n_out_p:]

    # ---- softmax (max-subtracted, exact normalization) ----
    # Padded gene columns carry a -1e30 bias -> exp underflows to 0, so they
    # do not inflate the denominator.
    m = jnp.max(logits, axis=-1, keepdims=True)
    e = jnp.exp(logits - m)
    denom = jnp.sum(e, axis=-1, keepdims=True)
    px_scale = e * pl.reciprocal(denom)                       # exact divide

    scale_ref[...] = px_scale
    # px_rate = exp(library) * px_scale   (library is (TB, 1), broadcasts)
    rate_ref[...] = jnp.exp(lib_ref[...]) * px_scale
    r_ref[...] = px_r
    drop_ref[...] = px_drop


def _round_up(x, m):
    return (x + m - 1) // m * m


@functools.partial(jax.jit,
                   static_argnames=("n_output", "n_cat", "block_b", "matmul_dtype"))
def decoder_scvi_forward(z, library, cat, params, *, n_output, n_cat,
                         block_b=256, matmul_dtype=jnp.bfloat16):
    """DecoderSCVI.forward('gene-cell', z, library, cat).

    z:       (B, n_input) f32
    library: (B, 1)       f32
    cat:     (B, 1)       int32 with n_cat categories
    Returns (px_scale, px_r, px_rate, px_dropout), each (B, n_output) f32.
    """
    B, n_input = z.shape
    n_hidden = params["w1_z"].shape[1]
    assert params["w1_cat"].shape[0] == n_cat

    # ---- gene-axis padding: lane-align n_output so slices and stores are dense
    n_out_p = _round_up(n_output, 128)
    pad_n = n_out_p - n_output

    def pad_cols(w):
        return jnp.pad(w, ((0, 0), (0, pad_n)))

    # Fused [W_scale | W_r | W_dropout] along N, bf16 operands for the MXU.
    w_out = jnp.concatenate(
        [pad_cols(params["w_scale"]), pad_cols(params["w_r"]),
         pad_cols(params["w_dropout"])], axis=1).astype(matmul_dtype)
    # Fused bias stays f32; padded scale columns get -1e30 so softmax ignores them.
    b_scale_p = jnp.pad(params["b_scale"], ((0, 0), (0, pad_n)),
                        constant_values=-1e30)
    b_out = jnp.concatenate(
        [b_scale_p, pad_cols(params["b_r"]), pad_cols(params["b_dropout"])],
        axis=1).astype(jnp.float32)

    w1_z = params["w1_z"].astype(matmul_dtype)
    # Categorical injection folded into a per-row bias (one_hot @ W1_cat + b1).
    b1_row = (params["b1"] + params["w1_cat"][cat[:, 0]]).astype(jnp.float32)

    # ---- batch tiling: multiple of 8, padded to a full tile; guarantee >=2
    # grid steps when the batch permits (v7x megacore sharding).
    tb = min(block_b, _round_up(B, 8))
    if _round_up(B, tb) // tb < 2 and B > 8:
        tb = _round_up((B + 1) // 2, 8)
    Bp = _round_up(B, tb)
    pad_b = Bp - B

    zp = jnp.pad(z, ((0, pad_b), (0, 0))).astype(matmul_dtype)
    b1p = jnp.pad(b1_row, ((0, pad_b), (0, 0)))
    libp = jnp.pad(library, ((0, pad_b), (0, 0))).astype(jnp.float32)

    grid = (Bp // tb,)
    row = lambda i: (i, 0)     # batch-tiled arrays
    const = lambda i: (0, 0)   # resident weights
    resident = pl.Buffered(1)  # constant block -> single buffer, no re-DMA

    in_specs = [
        pl.BlockSpec((tb, n_input), row),                                     # z
        pl.BlockSpec((tb, n_hidden), row),                                    # b1_row
        pl.BlockSpec((tb, 1), row),                                           # library
        pl.BlockSpec((n_input, n_hidden), const, pipeline_mode=resident),     # W1 (z)
        pl.BlockSpec((n_hidden, 3 * n_out_p), const, pipeline_mode=resident),  # [Ws|Wr|Wd]
        pl.BlockSpec((1, 3 * n_out_p), const, pipeline_mode=resident),        # fused bias
    ]
    out_spec = pl.BlockSpec((tb, n_out_p), row)
    out_sds = jax.ShapeDtypeStruct((Bp, n_out_p), jnp.float32)

    # ---- VMEM budget: single-buffered weights + double-buffered I/O tiles +
    # temporaries, with headroom, clamped to the physical VMEM of this chip.
    bpe = jnp.dtype(matmul_dtype).itemsize
    f32 = 4
    weight_bytes = ((n_input * n_hidden + n_hidden * 3 * n_out_p) * bpe
                    + 3 * n_out_p * f32)
    in_tile_bytes = tb * (n_input * bpe + n_hidden * f32 + f32)
    out_tile_bytes = 4 * tb * n_out_p * f32
    tmp_bytes = tb * (n_hidden + 4 * n_out_p) * f32
    vmem_est = weight_bytes + 2 * (in_tile_bytes + out_tile_bytes) + tmp_bytes
    try:
        phys_vmem = int(pltpu.get_tpu_info().vmem_capacity_bytes)
    except Exception:
        phys_vmem = 64 << 20            # conservative (v7x per-TC size)
    vmem_cap = min(int(0.9 * phys_vmem), 100 << 20)
    vmem_limit = min(max(int(1.35 * vmem_est), 32 << 20), vmem_cap)

    kernel = functools.partial(_decoder_kernel, n_out_p=n_out_p,
                               matmul_dtype=matmul_dtype)
    outs = pl.pallas_call(
        kernel,
        grid=grid,
        in_specs=in_specs,
        out_specs=(out_spec, out_spec, out_spec, out_spec),
        out_shape=(out_sds, out_sds, out_sds, out_sds),
        compiler_params=pltpu.CompilerParams(
            dimension_semantics=("parallel",),
            vmem_limit_bytes=vmem_limit),
    )(zp, b1p, libp, w1_z, w_out, b_out)

    return tuple(o[:B, :n_output] for o in outs)


def _init_params(key, n_input, n_cat, n_hidden, n_output):
    ks = jax.random.split(key, 8)

    def lin(kw, kb, fan_in, fan_out):
        bound = 1.0 / jnp.sqrt(float(fan_in))
        w = jax.random.uniform(kw, (fan_in, fan_out), jnp.float32, -bound, bound)
        b = jax.random.uniform(kb, (1, fan_out), jnp.float32, -bound, bound)
        return w, b

    w1, b1 = lin(ks[0], ks[1], n_input + n_cat, n_hidden)
    w_scale, b_scale = lin(ks[2], ks[3], n_hidden, n_output)
    w_r, b_r = lin(ks[4], ks[5], n_hidden, n_output)
    w_d, b_d = lin(ks[6], ks[7], n_hidden, n_output)
    return dict(w1_z=w1[:n_input], w1_cat=w1[n_input:], b1=b1,
                w_scale=w_scale, b_scale=b_scale,
                w_r=w_r, b_r=b_r, w_dropout=w_d, b_dropout=b_d)


def _reference(z, library, cat, params):
    """Pure-f32 reference of DecoderSCVI.forward('gene-cell', ...)."""
    n_cat = params["w1_cat"].shape[0]
    one_hot = jax.nn.one_hot(cat[:, 0], n_cat, dtype=z.dtype)
    px = jax.nn.relu(z @ params["w1_z"] + one_hot @ params["w1_cat"] + params["b1"])
    px_scale = jax.nn.softmax(px @ params["w_scale"] + params["b_scale"], axis=-1)
    px_r = px @ params["w_r"] + params["b_r"]
    px_rate = jnp.exp(library) * px_scale
    px_dropout = px @ params["w_dropout"] + params["b_dropout"]
    return px_scale, px_r, px_rate, px_dropout


if __name__ == "__main__":
    key = jax.random.PRNGKey(0)
    k_z, k_lib, k_cat, k_p = jax.random.split(key, 4)

    # Small shapes consistent with DecoderSCVI.  B and n_output are deliberately
    # NOT multiples of the tile sizes so the batch padding, the gene-axis
    # (128-lane) padding and the masked-softmax padding paths are exercised,
    # and the batch grid has two steps (pipeline + megacore path).
    B, n_input, n_cat, n_hidden, n_output = 200, 32, 3, 128, 200

    z = jax.random.normal(k_z, (B, n_input), jnp.float32)
    library = jax.random.normal(k_lib, (B, 1), jnp.float32)
    cat = jax.random.randint(k_cat, (B, 1), 0, n_cat, jnp.int32)
    params = _init_params(k_p, n_input, n_cat, n_hidden, n_output)

    outs = decoder_scvi_forward(z, library, cat, params,
                                n_output=n_output, n_cat=n_cat, block_b=256)
    outs = jax.block_until_ready(outs)

    refs = _reference(z, library, cat, params)
    names = ("px_scale", "px_r", "px_rate", "px_dropout")
    # bf16 matmul operands (f32 accumulation) vs. a pure-f32 reference ->
    # bf16-product-level tolerances.  Softmax normalization itself is exact.
    tols = {"px_scale": (1e-4, 5e-2), "px_rate": (1e-4, 5e-2),
            "px_r": (3e-2, 3e-2), "px_dropout": (3e-2, 3e-2)}
    for name, o, r in zip(names, outs, refs):
        assert o.shape == r.shape and o.dtype == r.dtype, name
        atol, rtol = tols[name]
        assert jnp.allclose(o, r, atol=atol, rtol=rtol), name

    print("KERNEL_OK")
</pallas_src>

<mosaic_0001>
module attributes {stable_mosaic.version = 11 : i64} {
  func.func @_decoder_kernel(%arg0: i32, %arg1: memref<104x32xbf16, #tpu.memory_space<vmem>>, %arg2: memref<104x128xf32, #tpu.memory_space<vmem>>, %arg3: memref<104x1xf32, #tpu.memory_space<vmem>>, %arg4: memref<32x128xbf16, #tpu.memory_space<vmem>>, %arg5: memref<128x768xbf16, #tpu.memory_space<vmem>>, %arg6: memref<1x768xf32, #tpu.memory_space<vmem>>, %arg7: memref<104x256xf32, #tpu.memory_space<vmem>>, %arg8: memref<104x256xf32, #tpu.memory_space<vmem>>, %arg9: memref<104x256xf32, #tpu.memory_space<vmem>>, %arg10: memref<104x256xf32, #tpu.memory_space<vmem>>) attributes {dimension_semantics = [#tpu.dimension_semantics<parallel>], iteration_bounds = array<i64: 2>, scalar_prefetch = 0 : i64, scratch_operands = 0 : i64, tpu.core_type = #tpu.core_type<tc>, window_params = [{transform_indices = @transform_0, window_bounds = array<i64: 104, 32>}, {transform_indices = @transform_1, window_bounds = array<i64: 104, 128>}, {transform_indices = @transform_2, window_bounds = array<i64: 104, 1>}, {pipeline_mode = #tpu.pipeline_mode<synchronous>, transform_indices = @transform_3, window_bounds = array<i64: 32, 128>}, {pipeline_mode = #tpu.pipeline_mode<synchronous>, transform_indices = @transform_4, window_bounds = array<i64: 128, 768>}, {pipeline_mode = #tpu.pipeline_mode<synchronous>, transform_indices = @transform_5, window_bounds = array<i64: 1, 768>}, {transform_indices = @transform_6, window_bounds = array<i64: 104, 256>}, {transform_indices = @transform_7, window_bounds = array<i64: 104, 256>}, {transform_indices = @transform_8, window_bounds = array<i64: 104, 256>}, {transform_indices = @transform_9, window_bounds = array<i64: 104, 256>}]} {
    %c0 = arith.constant 0 : index
    %c0_0 = arith.constant 0 : index
    %0 = vector.load %arg1[%c0, %c0_0] : memref<104x32xbf16, #tpu.memory_space<vmem>>, vector<104x32xbf16>
    %c0_1 = arith.constant 0 : index
    %c0_2 = arith.constant 0 : index
    %1 = vector.load %arg4[%c0_1, %c0_2] : memref<32x128xbf16, #tpu.memory_space<vmem>>, vector<32x128xbf16>
    %cst = arith.constant dense<0.000000e+00> : vector<104x128xf32>
    %2 = tpu.matmul %0, %1, %cst {dimension_numbers = #tpu.dot_dimension_numbers<[1], [0], [0], [1], [0, 0, 1, 1], [], []>} : vector<104x32xbf16>, vector<32x128xbf16>, vector<104x128xf32> -> vector<104x128xf32>
    %c0_3 = arith.constant 0 : index
    %c0_4 = arith.constant 0 : index
    %3 = vector.load %arg2[%c0_3, %c0_4] : memref<104x128xf32, #tpu.memory_space<vmem>>, vector<104x128xf32>
    %4 = arith.addf %2, %3 : vector<104x128xf32>
    %cst_5 = arith.constant 0.000000e+00 : f32
    %5 = vector.broadcast %cst_5 : f32 to vector<104x128xf32>
    %6 = arith.maximumf %4, %5 : vector<104x128xf32>
    %7 = arith.truncf %6 : vector<104x128xf32> to vector<104x128xbf16>
    %c0_6 = arith.constant 0 : index
    %c0_7 = arith.constant 0 : index
    %8 = vector.load %arg5[%c0_6, %c0_7] : memref<128x768xbf16, #tpu.memory_space<vmem>>, vector<128x768xbf16>
    %cst_8 = arith.constant dense<0.000000e+00> : vector<104x768xf32>
    %9 = tpu.matmul %7, %8, %cst_8 {dimension_numbers = #tpu.dot_dimension_numbers<[1], [0], [0], [1], [0, 0, 1, 1], [], []>} : vector<104x128xbf16>, vector<128x768xbf16>, vector<104x768xf32> -> vector<104x768xf32>
    %c0_9 = arith.constant 0 : index
    %c0_10 = arith.constant 0 : index
    %10 = vector.load %arg6[%c0_9, %c0_10] : memref<1x768xf32, #tpu.memory_space<vmem>>, vector<1x768xf32>
    %11 = vector.broadcast %10 : vector<1x768xf32> to vector<104x768xf32>
    %12 = arith.addf %9, %11 : vector<104x768xf32>
    %13 = vector.extract_strided_slice %12 {offsets = [0, 0], sizes = [104, 256], strides = [1, 1]} : vector<104x768xf32> to vector<104x256xf32>
    %14 = vector.extract_strided_slice %12 {offsets = [0, 256], sizes = [104, 256], strides = [1, 1]} : vector<104x768xf32> to vector<104x256xf32>
    %15 = vector.extract_strided_slice %12 {offsets = [0, 512], sizes = [104, 256], strides = [1, 1]} : vector<104x768xf32> to vector<104x256xf32>
    %cst_11 = arith.constant dense<0xFF800000> : vector<104xf32>
    %16 = vector.multi_reduction <maximumf>, %13, %cst_11 [1] : vector<104x256xf32> to vector<104xf32>
    %17 = vector.shape_cast %16 : vector<104xf32> to vector<104x1xf32>
    %18 = vector.broadcast %17 : vector<104x1xf32> to vector<104x256xf32>
    %19 = arith.subf %13, %18 : vector<104x256xf32>
    %20 = math.exp %19 : vector<104x256xf32>
    %cst_12 = arith.constant dense<0.000000e+00> : vector<104xf32>
    %21 = vector.multi_reduction <add>, %20, %cst_12 [1] : vector<104x256xf32> to vector<104xf32>
    %22 = vector.shape_cast %21 : vector<104xf32> to vector<104x1xf32>
    %23 = tpu.reciprocal %22 : vector<104x1xf32> -> vector<104x1xf32>
    %24 = vector.broadcast %23 : vector<104x1xf32> to vector<104x256xf32>
    %25 = arith.mulf %20, %24 : vector<104x256xf32>
    %c0_13 = arith.constant 0 : index
    %c0_14 = arith.constant 0 : index
    %26 = vector.load %arg7[%c0_13, %c0_14] : memref<104x256xf32, #tpu.memory_space<vmem>>, vector<104x256xf32>
    tpu.vector_store %arg7[%c0_13, %c0_14], %25 {strides = array<i32>} : memref<104x256xf32, #tpu.memory_space<vmem>>, vector<104x256xf32>,
    %c0_15 = arith.constant 0 : index
    %c0_16 = arith.constant 0 : index
    %27 = vector.load %arg3[%c0_15, %c0_16] : memref<104x1xf32, #tpu.memory_space<vmem>>, vector<104x1xf32>
    %28 = math.exp %27 : vector<104x1xf32>
    %29 = vector.broadcast %28 : vector<104x1xf32> to vector<104x256xf32>
    %30 = arith.mulf %29, %25 : vector<104x256xf32>
    %c0_17 = arith.constant 0 : index
    %c0_18 = arith.constant 0 : index
    %31 = vector.load %arg9[%c0_17, %c0_18] : memref<104x256xf32, #tpu.memory_space<vmem>>, vector<104x256xf32>
    tpu.vector_store %arg9[%c0_17, %c0_18], %30 {strides = array<i32>} : memref<104x256xf32, #tpu.memory_space<vmem>>, vector<104x256xf32>,
    %c0_19 = arith.constant 0 : index
    %c0_20 = arith.constant 0 : index
    %32 = vector.load %arg8[%c0_19, %c0_20] : memref<104x256xf32, #tpu.memory_space<vmem>>, vector<104x256xf32>
    tpu.vector_store %arg8[%c0_19, %c0_20], %14 {strides = array<i32>} : memref<104x256xf32, #tpu.memory_space<vmem>>, vector<104x256xf32>,
    %c0_21 = arith.constant 0 : index
    %c0_22 = arith.constant 0 : index
    %33 = vector.load %arg10[%c0_21, %c0_22] : memref<104x256xf32, #tpu.memory_space<vmem>>, vector<104x256xf32>
    tpu.vector_store %arg10[%c0_21, %c0_22], %15 {strides = array<i32>} : memref<104x256xf32, #tpu.memory_space<vmem>>, vector<104x256xf32>,
    return
  }
  func.func @transform_0(%arg0: i32) -> (i32, i32) {
    %c0_i32 = arith.constant 0 : i32
    %c0_i32_0 = arith.constant 0 : i32
    return %arg0, %c0_i32 : i32, i32
  }
  func.func @transform_1(%arg0: i32) -> (i32, i32) {
    %c0_i32 = arith.constant 0 : i32
    %c0_i32_0 = arith.constant 0 : i32
    return %arg0, %c0_i32 : i32, i32
  }
  func.func @transform_2(%arg0: i32) -> (i32, i32) {
    %c0_i32 = arith.constant 0 : i32
    %c0_i32_0 = arith.constant 0 : i32
    return %arg0, %c0_i32 : i32, i32
  }
  func.func @transform_3(%arg0: i32) -> (i32, i32) {
    %c0_i32 = arith.constant 0 : i32
    %c0_i32_0 = arith.constant 0 : i32
    %c0_i32_1 = arith.constant 0 : i32
    return %c0_i32, %c0_i32_0 : i32, i32
  }
  func.func @transform_4(%arg0: i32) -> (i32, i32) {
    %c0_i32 = arith.constant 0 : i32
    %c0_i32_0 = arith.constant 0 : i32
    %c0_i32_1 = arith.constant 0 : i32
    return %c0_i32, %c0_i32_0 : i32, i32
  }
  func.func @transform_5(%arg0: i32) -> (i32, i32) {
    %c0_i32 = arith.constant 0 : i32
    %c0_i32_0 = arith.constant 0 : i32
    %c0_i32_1 = arith.constant 0 : i32
    return %c0_i32, %c0_i32_0 : i32, i32
  }
  func.func @transform_6(%arg0: i32) -> (i32, i32) {
    %c0_i32 = arith.constant 0 : i32
    %c0_i32_0 = arith.constant 0 : i32
    return %arg0, %c0_i32 : i32, i32
  }
  func.func @transform_7(%arg0: i32) -> (i32, i32) {
    %c0_i32 = arith.constant 0 : i32
    %c0_i32_0 = arith.constant 0 : i32
    return %arg0, %c0_i32 : i32, i32
  }
  func.func @transform_8(%arg0: i32) -> (i32, i32) {
    %c0_i32 = arith.constant 0 : i32
    %c0_i32_0 = arith.constant 0 : i32
    return %arg0, %c0_i32 : i32, i32
  }
  func.func @transform_9(%arg0: i32) -> (i32, i32) {
    %c0_i32 = arith.constant 0 : i32
    %c0_i32_0 = arith.constant 0 : i32
    return %arg0, %c0_i32 : i32, i32
  }
}

</mosaic_0001>

<llo_original>
// kernel: decoder_scvi_forward.1
$region0: #{decoder_scvi_forward.1}
  #allocation0 [shape = 'u32[]', space=smem, size = 0x4, offset = 0x4, fixed_abs, tag = 'smem constant byte address 0x4 - core index']
  #allocation1 [shape = 'u32[144,128]{1,0:T(1,128)}', space=vmem, size = 0x12000, scoped, tag = 'internal scratch']
  %s0 = inlined_call_operand.vmem [shape: bf16[208,32], index: 0, kind: input, shape index: {}]
  %s1 = inlined_call_operand.vmem [shape: f32[208,128], index: 1, kind: input, shape index: {}]
  %s2 = inlined_call_operand.vmem [shape: f32[208,1], index: 2, kind: input, shape index: {}]
  %s3 = inlined_call_operand.vmem [shape: bf16[32,128], index: 3, kind: input, shape index: {}]
  %s4 = inlined_call_operand.vmem [shape: bf16[128,768], index: 4, kind: input, shape index: {}]
  %s5 = inlined_call_operand.vmem [shape: f32[1,768], index: 5, kind: input, shape index: {}]
  %s6 = inlined_call_operand.vmem [shape: f32[208,256], index: 6, kind: output, shape index: {0}]
  %s7 = inlined_call_operand.vmem [shape: f32[208,256], index: 7, kind: output, shape index: {1}]
  %s8 = inlined_call_operand.vmem [shape: f32[208,256], index: 8, kind: output, shape index: {2}]
  %s9 = inlined_call_operand.vmem [shape: f32[208,256], index: 9, kind: output, shape index: {3}]
  %10 = xla_tuple %s6, %s7, %s8, %s9
  %s11 = sld [smem:[#allocation0]]
  $region81: #{decoder_scvi_forward.1} parent=0
    _
  %s13 = ssub.s32 1, %s11
  %s14 = scalar_select 0, %s13, %s11
  loop: start=0, step=1, limit=4
  $region2: #{decoder_scvi_forward.1} parent=0 // loop_pre_header
    _
  $region3: #{decoder_scvi_forward.1} parent=0 // loop_header
    %s16 = sphi 0, %s20
    %p17 = scmp.ge.s32.totalorder %s16, 4
    %s26 = sphi 0, %s28
    %s29 = sphi 0, %s26
    %s30 = sphi 0, %s29
    %s46 = sphi 0, %s30
    %s52 = sphi 0, %s54
    %s55 = sphi 0, %s52
    %s56 = sphi 0, %s55
    %s72 = sphi 0, %s56
    %s78 = sphi 0, %s80
    %s81 = sphi 0, %s78
    %s82 = sphi 0, %s81
    %s98 = sphi 0, %s82
    %s102 = sphi 0, %s102
    %s104 = sphi 0, %s102
    %s105 = sphi 0, %s104
    %s119 = sphi 0, %s105
    %s123 = sphi 0, %s123
    %s125 = sphi 0, %s123
    %s126 = sphi 0, %s125
    %s140 = sphi 0, %s126
    %s144 = sphi 0, %s144
    %s146 = sphi 0, %s144
    %s147 = sphi 0, %s146
    %s161 = sphi 0, %s147
    %s167 = sphi 0, %s169
    %s170 = sphi 0, %s167
    %s171 = sphi 0, %s170
    %s187 = sphi 0, %s171
    %s193 = sphi 0, %s195
    %s196 = sphi 0, %s193
    %s197 = sphi 0, %s196
    %s213 = sphi 0, %s197
    %s219 = sphi 0, %s221
    %s222 = sphi 0, %s219
    %s223 = sphi 0, %s222
    %s239 = sphi 0, %s223
    %s245 = sphi 0, %s247
    %s248 = sphi 0, %s245
    %s249 = sphi 0, %s248
    %s265 = sphi 0, %s249
  $region4: #{decoder_scvi_forward.1} parent=0 // loop_header_branch
    %19 = sbr.rel (%p17) target = $region8
  $region5: #{decoder_scvi_forward.1} parent=0 // loop_body
    %s21 = ssub.s32 %s16, 1
    %s22 = ssub.s32 %s16, 2
    %s23 = sadd.s32 %s16, 1
    %s24 = ssub.s32 %s16, %s23
    %p25 = scmp.eq.s32.totalorder %s24, 0
    %s27 = sadd.s32 %s26, 1
    %s28 = scalar_select %p25, %s26, %s27
    %p31 = pneg %p25
    %p32 = scmp.eq.s32.totalorder %s16, 1
    %p33 = por %p31, %p32
    %p34 = scmp.ne.s32.totalorder %s26, %s29
    %p35 = scmp.eq.s32.totalorder %s16, 0
    %p36 = por %p34, %p35
    %p37 = scmp.ne.s32.totalorder %s26, %s29
    %p38 = scmp.eq.s32.totalorder %s21, 1
    %p39 = por %p37, %p38
    %p40 = scmp.ne.s32.totalorder %s29, %s30
    %p41 = scmp.eq.s32.totalorder %s21, 0
    %p42 = por %p40, %p41
    %p43 = scmp.ne.s32.totalorder %s29, %s30
    %p44 = scmp.eq.s32.totalorder %s22, 1
    %p45 = por %p43, %p44
    %p47 = scmp.ne.s32.totalorder %s30, %s46
    %p48 = scmp.eq.s32.totalorder %s22, 0
    %p49 = por %p47, %p48
    %s50 = ssub.s32 %s16, %s23
    %p51 = scmp.eq.s32.totalorder %s50, 0
    %s53 = sadd.s32 %s52, 1
    %s54 = scalar_select %p51, %s52, %s53
    %p57 = pneg %p51
    %p58 = scmp.eq.s32.totalorder %s16, 1
    %p59 = por %p57, %p58
    %p60 = scmp.ne.s32.totalorder %s52, %s55
    %p61 = scmp.eq.s32.totalorder %s16, 0
    %p62 = por %p60, %p61
    %p63 = scmp.ne.s32.totalorder %s52, %s55
    %p64 = scmp.eq.s32.totalorder %s21, 1
    %p65 = por %p63, %p64
    %p66 = scmp.ne.s32.totalorder %s55, %s56
    %p67 = scmp.eq.s32.totalorder %s21, 0
    %p68 = por %p66, %p67
    %p69 = scmp.ne.s32.totalorder %s55, %s56
    %p70 = scmp.eq.s32.totalorder %s22, 1
    %p71 = por %p69, %p70
    %p73 = scmp.ne.s32.totalorder %s56, %s72
    %p74 = scmp.eq.s32.totalorder %s22, 0
    %p75 = por %p73, %p74
    %s76 = ssub.s32 %s16, %s23
    %p77 = scmp.eq.s32.totalorder %s76, 0
    %s79 = sadd.s32 %s78, 1
    %s80 = scalar_select %p77, %s78, %s79
    %p83 = pneg %p77
    %p84 = scmp.eq.s32.totalorder %s16, 1
    %p85 = por %p83, %p84
    %p86 = scmp.ne.s32.totalorder %s78, %s81
    %p87 = scmp.eq.s32.totalorder %s16, 0
    %p88 = por %p86, %p87
    %p89 = scmp.ne.s32.totalorder %s78, %s81
    %p90 = scmp.eq.s32.totalorder %s21, 1
    %p91 = por %p89, %p90
    %p92 = scmp.ne.s32.totalorder %s81, %s82
    %p93 = scmp.eq.s32.totalorder %s21, 0
    %p94 = por %p92, %p93
    %p95 = scmp.ne.s32.totalorder %s81, %s82
    %p96 = scmp.eq.s32.totalorder %s22, 1
    %p97 = por %p95, %p96
    %p99 = scmp.ne.s32.totalorder %s82, %s98
    %p100 = scmp.eq.s32.totalorder %s22, 0
    %p101 = por %p99, %p100
    %s103 = sadd.s32 %s102, 1
    %p106 = scmp.eq.s32.totalorder %s16, 1
    %p107 = scmp.ne.s32.totalorder %s102, %s104
    %p108 = scmp.eq.s32.totalorder %s16, 0
    %p109 = por %p107, %p108
    %p110 = scmp.ne.s32.totalorder %s102, %s104
    %p111 = scmp.eq.s32.totalorder %s21, 1
    %p112 = por %p110, %p111
    %p113 = scmp.ne.s32.totalorder %s104, %s105
    %p114 = scmp.eq.s32.totalorder %s21, 0
    %p115 = por %p113, %p114
    %p116 = scmp.ne.s32.totalorder %s104, %s105
    %p117 = scmp.eq.s32.totalorder %s22, 1
    %p118 = por %p116, %p117
    %p120 = scmp.ne.s32.totalorder %s105, %s119
    %p121 = scmp.eq.s32.totalorder %s22, 0
    %p122 = por %p120, %p121
    %s124 = sadd.s32 %s123, 1
    %p127 = scmp.eq.s32.totalorder %s16, 1
    %p128 = scmp.ne.s32.totalorder %s123, %s125
    %p129 = scmp.eq.s32.totalorder %s16, 0
    %p130 = por %p128, %p129
    %p131 = scmp.ne.s32.totalorder %s123, %s125
    %p132 = scmp.eq.s32.totalorder %s21, 1
    %p133 = por %p131, %p132
    %p134 = scmp.ne.s32.totalorder %s125, %s126
    %p135 = scmp.eq.s32.totalorder %s21, 0
    %p136 = por %p134, %p135
    %p137 = scmp.ne.s32.totalorder %s125, %s126
    %p138 = scmp.eq.s32.totalorder %s22, 1
    %p139 = por %p137, %p138
    %p141 = scmp.ne.s32.totalorder %s126, %s140
    %p142 = scmp.eq.s32.totalorder %s22, 0
    %p143 = por %p141, %p142
    %s145 = sadd.s32 %s144, 1
    %p148 = scmp.eq.s32.totalorder %s16, 1
    %p149 = scmp.ne.s32.totalorder %s144, %s146
    %p150 = scmp.eq.s32.totalorder %s16, 0
    %p151 = por %p149, %p150
    %p152 = scmp.ne.s32.totalorder %s144, %s146
    %p153 = scmp.eq.s32.totalorder %s21, 1
    %p154 = por %p152, %p153
    %p155 = scmp.ne.s32.totalorder %s146, %s147
    %p156 = scmp.eq.s32.totalorder %s21, 0
    %p157 = por %p155, %p156
    %p158 = scmp.ne.s32.totalorder %s146, %s147
    %p159 = scmp.eq.s32.totalorder %s22, 1
    %p160 = por %p158, %p159
    %p162 = scmp.ne.s32.totalorder %s147, %s161
    %p163 = scmp.eq.s32.totalorder %s22, 0
    %p164 = por %p162, %p163
    %s165 = ssub.s32 %s16, %s23
    %p166 = scmp.eq.s32.totalorder %s165, 0
    %s168 = sadd.s32 %s167, 1
    %s169 = scalar_select %p166, %s167, %s168
    %p172 = pneg %p166
    %p173 = scmp.eq.s32.totalorder %s16, 1
    %p174 = por %p172, %p173
    %p175 = scmp.ne.s32.totalorder %s167, %s170
    %p176 = scmp.eq.s32.totalorder %s16, 0
    %p177 = por %p175, %p176
    %p178 = scmp.ne.s32.totalorder %s167, %s170
    %p179 = scmp.eq.s32.totalorder %s21, 1
    %p180 = por %p178, %p179
    %p181 = scmp.ne.s32.totalorder %s170, %s171
    %p182 = scmp.eq.s32.totalorder %s21, 0
    %p183 = por %p181, %p182
    %p184 = scmp.ne.s32.totalorder %s170, %s171
    %p185 = scmp.eq.s32.totalorder %s22, 1
    %p186 = por %p184, %p185
    %p188 = scmp.ne.s32.totalorder %s171, %s187
    %p189 = scmp.eq.s32.totalorder %s22, 0
    %p190 = por %p188, %p189
    %s191 = ssub.s32 %s16, %s23
    %p192 = scmp.eq.s32.totalorder %s191, 0
    %s194 = sadd.s32 %s193, 1
    %s195 = scalar_select %p192, %s193, %s194
    %p198 = pneg %p192
    %p199 = scmp.eq.s32.totalorder %s16, 1
    %p200 = por %p198, %p199
    %p201 = scmp.ne.s32.totalorder %s193, %s196
    %p202 = scmp.eq.s32.totalorder %s16, 0
    %p203 = por %p201, %p202
    %p204 = scmp.ne.s32.totalorder %s193, %s196
    %p205 = scmp.eq.s32.totalorder %s21, 1
    %p206 = por %p204, %p205
    %p207 = scmp.ne.s32.totalorder %s196, %s197
    %p208 = scmp.eq.s32.totalorder %s21, 0
    %p209 = por %p207, %p208
    %p210 = scmp.ne.s32.totalorder %s196, %s197
    %p211 = scmp.eq.s32.totalorder %s22, 1
    %p212 = por %p210, %p211
    %p214 = scmp.ne.s32.totalorder %s197, %s213
    %p215 = scmp.eq.s32.totalorder %s22, 0
    %p216 = por %p214, %p215
    %s217 = ssub.s32 %s16, %s23
    %p218 = scmp.eq.s32.totalorder %s217, 0
    %s220 = sadd.s32 %s219, 1
    %s221 = scalar_select %p218, %s219, %s220
    %p224 = pneg %p218
    %p225 = scmp.eq.s32.totalorder %s16, 1
    %p226 = por %p224, %p225
    %p227 = scmp.ne.s32.totalorder %s219, %s222
    %p228 = scmp.eq.s32.totalorder %s16, 0
    %p229 = por %p227, %p228
    %p230 = scmp.ne.s32.totalorder %s219, %s222
    %p231 = scmp.eq.s32.totalorder %s21, 1
    %p232 = por %p230, %p231
    %p233 = scmp.ne.s32.totalorder %s222, %s223
    %p234 = scmp.eq.s32.totalorder %s21, 0
    %p235 = por %p233, %p234
    %p236 = scmp.ne.s32.totalorder %s222, %s223
    %p237 = scmp.eq.s32.totalorder %s22, 1
    %p238 = por %p236, %p237
    %p240 = scmp.ne.s32.totalorder %s223, %s239
    %p241 = scmp.eq.s32.totalorder %s22, 0
    %p242 = por %p240, %p241
    %s243 = ssub.s32 %s16, %s23
    %p244 = scmp.eq.s32.totalorder %s243, 0
    %s246 = sadd.s32 %s245, 1
    %s247 = scalar_select %p244, %s245, %s246
    %p250 = pneg %p244
    %p251 = scmp.eq.s32.totalorder %s16, 1
    %p252 = por %p250, %p251
    %p253 = scmp.ne.s32.totalorder %s245, %s248
    %p254 = scmp.eq.s32.totalorder %s16, 0
    %p255 = por %p253, %p254
    %p256 = scmp.ne.s32.totalorder %s245, %s248
    %p257 = scmp.eq.s32.totalorder %s21, 1
    %p258 = por %p256, %p257
    %p259 = scmp.ne.s32.totalorder %s248, %s249
    %p260 = scmp.eq.s32.totalorder %s21, 0
    %p261 = por %p259, %p260
    %p262 = scmp.ne.s32.totalorder %s248, %s249
    %p263 = scmp.eq.s32.totalorder %s22, 1
    %p264 = por %p262, %p263
    %p266 = scmp.ne.s32.totalorder %s249, %s265
    %p267 = scmp.eq.s32.totalorder %s22, 0
    %p268 = por %p266, %p267
    %p269 = scmp.le.s32.totalorder 1, %s16
    %p270 = scmp.lt.s32.totalorder %s16, 3
    %p271 = pnand %p269, %p270
    %p272 = pneg %p271
    // Predicated region
    $region9: #{decoder_scvi_forward.1} parent=5 // pred_check
      _
    $region10: #{decoder_scvi_forward.1} parent=5 // pred_check_branch
      %274 = sbr.rel (%p271) target = $region12
    $region11: #{decoder_scvi_forward.1} parent=5 // pred_region
      %s275 = ssub.s32 %s16, 1
      // Predicated region
      $region13: #{decoder_scvi_forward.1} parent=11 // pred_check
        %p276 = pneg %p115
      $region14: #{decoder_scvi_forward.1} parent=11 // pred_check_branch
        %278 = sbr.rel (%p276) target = $region16
      $region15: #{decoder_scvi_forward.1} parent=11 // pred_region
        _
      $region16: #{decoder_scvi_forward.1} parent=11 // pred_fallthru
        _
      // Predicated region
      $region17: #{decoder_scvi_forward.1} parent=11 // pred_check
        %p279 = pneg %p136
      $region18: #{decoder_scvi_forward.1} parent=11 // pred_check_branch
        %281 = sbr.rel (%p279) target = $region20
      $region19: #{decoder_scvi_forward.1} parent=11 // pred_region
        _
      $region20: #{decoder_scvi_forward.1} parent=11 // pred_fallthru
        _
      // Predicated region
      $region21: #{decoder_scvi_forward.1} parent=11 // pred_check
        %p282 = pneg %p157
      $region22: #{decoder_scvi_forward.1} parent=11 // pred_check_branch
        %284 = sbr.rel (%p282) target = $region24
      $region23: #{decoder_scvi_forward.1} parent=11 // pred_region
        _
      $region24: #{decoder_scvi_forward.1} parent=11 // pred_fallthru
        _
    $region12: #{decoder_scvi_forward.1} parent=5 // pred_fallthru
      _
    %p285 = scmp.lt.s32.totalorder %s16, 2
    // Predicated region
    $region25: #{decoder_scvi_forward.1} parent=5 // pred_check
      %p286 = pneg %p285
    $region26: #{decoder_scvi_forward.1} parent=5 // pred_check_branch
      %288 = sbr.rel (%p286) target = $region28
    $region27: #{decoder_scvi_forward.1} parent=5 // pred_region
      // Predicated region
      $region29: #{decoder_scvi_forward.1} parent=27 // pred_check
        %p289 = pneg %p36
      $region30: #{decoder_scvi_forward.1} parent=27 // pred_check_branch
        %291 = sbr.rel (%p289) target = $region32
      $region31: #{decoder_scvi_forward.1} parent=27 // pred_region
        %s292 = smul.u32 13, %s16
        %p293 = scmp.lt.s32.totalorder %s292, 25
        %s294 = scalar_select %p293, %s292, 25
        %s295 = smul.addr %s294, 4
        %s296 = scalar_lea.vmem %s0, %s295
        %s297 = smul.u32 13, %s16
      $region32: #{decoder_scvi_forward.1} parent=27 // pred_fallthru
        _
      // Predicated region
      $region33: #{decoder_scvi_forward.1} parent=27 // pred_check
        %p298 = pneg %p62
      $region34: #{decoder_scvi_forward.1} parent=27 // pred_check_branch
        %300 = sbr.rel (%p298) target = $region36
      $region35: #{decoder_scvi_forward.1} parent=27 // pred_region
        %s301 = smul.u32 13, %s16
        %p302 = scmp.lt.s32.totalorder %s301, 25
        %s303 = scalar_select %p302, %s301, 25
        %s304 = smul.addr %s303, 8
        %s305 = scalar_lea.vmem %s1, %s304
        %s306 = smul.u32 13, %s16
      $region36: #{decoder_scvi_forward.1} parent=27 // pred_fallthru
        _
      // Predicated region
      $region37: #{decoder_scvi_forward.1} parent=27 // pred_check
        %p307 = pneg %p88
      $region38: #{decoder_scvi_forward.1} parent=27 // pred_check_branch
        %309 = sbr.rel (%p307) target = $region40
      $region39: #{decoder_scvi_forward.1} parent=27 // pred_region
        %s310 = smul.u32 13, %s16
        %p311 = scmp.lt.s32.totalorder %s310, 25
        %s312 = scalar_select %p311, %s310, 25
        %s313 = smul.addr %s312, 8
        %s314 = scalar_lea.vmem %s2, %s313
        %s315 = smul.u32 13, %s16
      $region40: #{decoder_scvi_forward.1} parent=27 // pred_fallthru
        _
    $region28: #{decoder_scvi_forward.1} parent=5 // pred_fallthru
      _
    %p316 = scmp.le.s32.totalorder 1, %s16
    %p317 = scmp.lt.s32.totalorder %s16, 3
    %p318 = pnand %p316, %p317
    %p319 = pneg %p318
    // Predicated region
    $region41: #{decoder_scvi_forward.1} parent=5 // pred_check
      _
    $region42: #{decoder_scvi_forward.1} parent=5 // pred_check_branch
      %321 = sbr.rel (%p318) target = $region44
    $region43: #{decoder_scvi_forward.1} parent=5 // pred_region
      %s322 = ssub.s32 %s16, 1
      %s323 = smul.u32 13, %s21
      %p324 = scmp.lt.s32.totalorder %s323, 25
      %s325 = scalar_select %p324, %s323, 25
      %s326 = smul.addr %s325, 4
      %s327 = scalar_lea.vmem %s0, %s326
      %p328 = pneg %p42
      %p329 = pneg %p39
      %s330 = smul.u32 13, %s21
      %p331 = scmp.lt.s32.totalorder %s330, 25
      %s332 = scalar_select %p331, %s330, 25
      %s333 = smul.addr %s332, 8
      %s334 = scalar_lea.vmem %s1, %s333
      %p335 = pneg %p68
      %p336 = pneg %p65
      %s337 = smul.u32 13, %s21
      %p338 = scmp.lt.s32.totalorder %s337, 25
      %s339 = scalar_select %p338, %s337, 25
      %s340 = smul.addr %s339, 8
      %s341 = scalar_lea.vmem %s2, %s340
      %p342 = pneg %p94
      %p343 = pneg %p91
      %p344 = pneg %p115
      %p345 = pneg %p112
      %p346 = pneg %p136
      %p347 = pneg %p133
      %p348 = pneg %p157
      %p349 = pneg %p154
      %p350 = pneg %p183
      %p351 = pneg %p180
      %s352 = smul.u32 13, %s21
      %p353 = scmp.lt.s32.totalorder %s352, 25
      %s354 = scalar_select %p353, %s352, 25
      %s355 = smul.addr %s354, 2
      %s356 = smul.addr %s355, 8
      %s357 = scalar_lea.vmem %s6, %s356
      %p358 = pneg %p209
      %p359 = pneg %p206
      %s360 = smul.u32 13, %s21
      %p361 = scmp.lt.s32.totalorder %s360, 25
      %s362 = scalar_select %p361, %s360, 25
      %s363 = smul.addr %s362, 2
      %s364 = smul.addr %s363, 8
      %s365 = scalar_lea.vmem %s7, %s364
      %p366 = pneg %p235
      %p367 = pneg %p232
      %s368 = smul.u32 13, %s21
      %p369 = scmp.lt.s32.totalorder %s368, 25
      %s370 = scalar_select %p369, %s368, 25
      %s371 = smul.addr %s370, 2
      %s372 = smul.addr %s371, 8
      %s373 = scalar_lea.vmem %s8, %s372
      %p374 = pneg %p261
      %p375 = pneg %p258
      %s376 = smul.u32 13, %s21
      %p377 = scmp.lt.s32.totalorder %s376, 25
      %s378 = scalar_select %p377, %s376, 25
      %s379 = smul.addr %s378, 2
      %s380 = smul.addr %s379, 8
      %s381 = scalar_lea.vmem %s9, %s380
      %s382 = smul.u32 13, %s21
      %p383 = scmp.lt.s32.totalorder %s382, 25
      %s384 = scalar_select %p383, %s382, 25
      %s385 = smul.addr %s384, 4
      %s386 = scalar_lea.vmem %s0, %s385
      %s387 = smul.u32 13, %s21
      %s388 = smul.u32 13, %s21
      %p389 = scmp.lt.s32.totalorder %s388, 25
      %s390 = scalar_select %p389, %s388, 25
      %s391 = smul.addr %s390, 8
      %s392 = scalar_lea.vmem %s1, %s391
      %s393 = smul.u32 13, %s21
      %s394 = smul.u32 13, %s21
      %p395 = scmp.lt.s32.totalorder %s394, 25
      %s396 = scalar_select %p395, %s394, 25
      %s397 = smul.addr %s396, 8
      %s398 = scalar_lea.vmem %s2, %s397
      %s399 = smul.u32 13, %s21
      %s400 = smul.u32 13, %s21
      %p401 = scmp.lt.s32.totalorder %s400, 25
      %s402 = scalar_select %p401, %s400, 25
      %s403 = smul.addr %s402, 2
      %s404 = smul.addr %s403, 8
      %s405 = scalar_lea.vmem %s6, %s404
      %s406 = smul.u32 13, %s21
      %s407 = smul.u32 13, %s21
      %p408 = scmp.lt.s32.totalorder %s407, 25
      %s409 = scalar_select %p408, %s407, 25
      %s410 = smul.addr %s409, 2
      %s411 = smul.addr %s410, 8
      %s412 = scalar_lea.vmem %s7, %s411
      %s413 = smul.u32 13, %s21
      %s414 = smul.u32 13, %s21
      %p415 = scmp.lt.s32.totalorder %s414, 25
      %s416 = scalar_select %p415, %s414, 25
      %s417 = smul.addr %s416, 2
      %s418 = smul.addr %s417, 8
      %s419 = scalar_lea.vmem %s8, %s418
      %s420 = smul.u32 13, %s21
      %s421 = smul.u32 13, %s21
      %p422 = scmp.lt.s32.totalorder %s421, 25
      %s423 = scalar_select %p422, %s421, 25
      %s424 = smul.addr %s423, 2
      %s425 = smul.addr %s424, 8
      %s426 = scalar_lea.vmem %s9, %s425
      %s427 = smul.u32 13, %s21
      %v429 = vld [vmem:[%s386] sm:$0xf]
      %v430 = vld [vmem:[%s386 + $0x4] sm:$0xf]
      %v431 = vld [vmem:[%s386 + $0x8] sm:$0xf]
      %v432 = vld [vmem:[%s386 + $0xc] sm:$0xf]
      %v433 = vld [vmem:[%s386 + $0x10] sm:$0xf]
      %v434 = vld [vmem:[%s386 + $0x14] sm:$0xf]
      %v435 = vld [vmem:[%s386 + $0x18] sm:$0xf]
      %v436 = vld [vmem:[%s386 + $0x1c] sm:$0xf]
      %v437 = vld [vmem:[%s386 + $0x20] sm:$0xf]
      %v438 = vld [vmem:[%s386 + $0x24] sm:$0xf]
      %v439 = vld [vmem:[%s386 + $0x28] sm:$0xf]
      %v440 = vld [vmem:[%s386 + $0x2c] sm:$0xf]
      %v441 = vld [vmem:[%s386 + $0x30] sm:$0xf]
      %v442 = vld [vmem:[%s3] sm:$0xf]
      %v443 = vld [vmem:[%s3 + $0x4] sm:$0xf]
      %v444 = vld [vmem:[%s3 + $0x8] sm:$0xf]
      %v445 = vld [vmem:[%s3 + $0xc] sm:$0xf]
      %v446 = vld [vmem:[%s392] sm:$0xff]
      %v447 = vld [vmem:[%s392 + $0x8] sm:$0xff]
      %v448 = vld [vmem:[%s392 + $0x10] sm:$0xff]
      %v449 = vld [vmem:[%s392 + $0x18] sm:$0xff]
      %v450 = vld [vmem:[%s392 + $0x20] sm:$0xff]
      %v451 = vld [vmem:[%s392 + $0x28] sm:$0xff]
      %v452 = vld [vmem:[%s392 + $0x30] sm:$0xff]
      %v453 = vld [vmem:[%s392 + $0x38] sm:$0xff]
      %v454 = vld [vmem:[%s392 + $0x40] sm:$0xff]
      %v455 = vld [vmem:[%s392 + $0x48] sm:$0xff]
      %v456 = vld [vmem:[%s392 + $0x50] sm:$0xff]
      %v457 = vld [vmem:[%s392 + $0x58] sm:$0xff]
      %v458 = vld [vmem:[%s392 + $0x60] sm:$0xff]
      %v472 = vunpack.c.l.b16 %v429
      %v473 = vunpack.c.l.b16 %v430
      %v474 = vunpack.c.l.b16 %v431
      %v475 = vunpack.c.l.b16 %v432
      %v476 = vunpack.c.l.b16 %v433
      %v477 = vunpack.c.l.b16 %v434
      %v478 = vunpack.c.l.b16 %v435
      %v479 = vunpack.c.l.b16 %v436
      %v480 = vunpack.c.l.b16 %v437
      %v481 = vunpack.c.l.b16 %v438
      %v482 = vunpack.c.l.b16 %v439
      %v483 = vunpack.c.l.b16 %v440
      %v484 = vunpack.c.l.b16 %v441
      %v485 = vpack.c.b16 %v473, %v472
      %v486 = vpack.c.b16 %v475, %v474
      %v487 = vpack.c.b16 %v477, %v476
      %v488 = vpack.c.b16 %v479, %v478
      %v489 = vpack.c.b16 %v481, %v480
      %v490 = vpack.c.b16 %v483, %v482
      %v491 = vpack.c.b16 %v484, %v484
      %v496 = vunpack.c.l.b16 %v442
      %v497 = vunpack.c.l.b16 %v443
      %v498 = vunpack.c.l.b16 %v444
      %v499 = vunpack.c.l.b16 %v445
      %v500 = vpack.c.b16 %v497, %v496
      %v501 = vpack.c.b16 %v499, %v498
      %vm504 = vcmask 261120
      %v506 = vsel %vm504, %v485, 0
      %v509 = vsel %vm504, %v486, 0
      %v512 = vsel %vm504, %v487, 0
      %v515 = vsel %vm504, %v488, 0
      %v518 = vsel %vm504, %v489, 0
      %v521 = vsel %vm504, %v490, 0
      %v524 = vsel %vm504, %v491, 0
      %526 = vmatprep.subr.bf16.mxu0 0
      %527 = vmatpush1.bf16.msra.mxu0 0
      %528 = vmatprep.subr.bf16.mxu0 0
      %529 = vmatpush1.bf16.msra.mxu0 0
      %530 = vmatprep.subr.bf16.mxu0 0
      %531 = vmatpush1.bf16.msra.mxu0 0
      %532 = vmatprep.subr.bf16.mxu0 0
      %533 = vmatpush1.bf16.msra.mxu0 0
      %534 = vmatprep.subr.bf16.mxu0 0
      %535 = vmatpush1.bf16.msra.mxu0 0
      %536 = vmatprep.subr.bf16.mxu0 0
      %537 = vmatpush1.bf16.msra.mxu0 0
      %538 = vmatprep.subr.bf16.mxu0 0
      %539 = vmatpush1.bf16.msra.mxu0 %v501
      %540 = vmatprep.subr.bf16.mxu0 0
      %541 = vmatpush1.bf16.msra.mxu0 %v500
      %542 = vmatprep.subr.bf16.mxu0 0
      %543 = vmatpush2.bf16.msra.mxu0 0
      %544 = vmatprep.subr.bf16.mxu0 0
      %545 = vmatpush2.bf16.msra.mxu0 0
      %546 = vmatprep.subr.bf16.mxu0 0
      %547 = vmatpush2.bf16.msra.mxu0 0
      %548 = vmatprep.subr.bf16.mxu0 0
      %549 = vmatpush2.bf16.msra.mxu0 0
      %550 = vmatprep.subr.bf16.mxu0 0
      %551 = vmatpush2.bf16.msra.mxu0 0
      %552 = vmatprep.subr.bf16.mxu0 0
      %553 = vmatpush2.bf16.msra.mxu0 0
      %554 = vmatprep.subr.bf16.mxu0 0
      %555 = vmatpush2.bf16.msra.mxu0 0
      %556 = vmatprep.subr.bf16.mxu0 0
      %557 = vmatpush2.bf16.msra.mxu0 0
      %558 = vmatprep.mubr.bf16.mxu0 0
      %559 = vmatmul.mubr.bf16.gmra.mxu0 %v506
      %v560 = vpop.f32.mrf.mxu0
      %v561 = vadd.f32 %v446, %v560
      %v562 = vpop.f32.mrf.mxu0
      %v563 = vpop.f32.mrf.mxu0
      %v564 = vadd.f32 %v447, %v563
      %v565 = vpop.f32.mrf.mxu0
      %566 = vmatprep.mubr.bf16.mxu0 0
      %567 = vmatmul.mubr.bf16.gmra.mxu0 %v509
      %v568 = vpop.f32.mrf.mxu0
      %v569 = vadd.f32 %v448, %v568
      %v570 = vpop.f32.mrf.mxu0
      %v571 = vpop.f32.mrf.mxu0
      %v572 = vadd.f32 %v449, %v571
      %v573 = vpop.f32.mrf.mxu0
      %574 = vmatprep.mubr.bf16.mxu0 0
      %575 = vmatmul.mubr.bf16.gmra.mxu0 %v512
      %v576 = vpop.f32.mrf.mxu0
      %v577 = vadd.f32 %v450, %v576
      %v578 = vpop.f32.mrf.mxu0
      %v579 = vpop.f32.mrf.mxu0
      %v580 = vadd.f32 %v451, %v579
      %v581 = vpop.f32.mrf.mxu0
      %582 = vmatprep.mubr.bf16.mxu0 0
      %583 = vmatmul.mubr.bf16.gmra.mxu0 %v515
      %v584 = vpop.f32.mrf.mxu0
      %v585 = vadd.f32 %v452, %v584
      %v586 = vpop.f32.mrf.mxu0
      %v587 = vpop.f32.mrf.mxu0
      %v588 = vadd.f32 %v453, %v587
      %v589 = vpop.f32.mrf.mxu0
      %590 = vmatprep.mubr.bf16.mxu0 0
      %591 = vmatmul.mubr.bf16.gmra.mxu0 %v518
      %v592 = vpop.f32.mrf.mxu0
      %v593 = vadd.f32 %v454, %v592
      %v594 = vpop.f32.mrf.mxu0
      %v595 = vpop.f32.mrf.mxu0
      %v596 = vadd.f32 %v455, %v595
      %v597 = vpop.f32.mrf.mxu0
      %598 = vmatprep.mubr.bf16.mxu0 0
      %599 = vmatmul.mubr.bf16.gmra.mxu0 %v521
      %v600 = vpop.f32.mrf.mxu0
      %v601 = vadd.f32 %v456, %v600
      %v602 = vpop.f32.mrf.mxu0
      %v603 = vpop.f32.mrf.mxu0
      %v604 = vadd.f32 %v457, %v603
      %v605 = vpop.f32.mrf.mxu0
      %606 = vmatprep.mubr.bf16.mxu0 0
      %607 = vmatmul.mubr.bf16.gmra.mxu0 %v524
      %v608 = vpop.f32.mrf.mxu0
      %v609 = vadd.f32 %v458, %v608
      %v610 = vpop.f32.mrf.mxu0
      %v611 = vpop.f32.mrf.mxu0
      %v612 = vpop.f32.mrf.mxu0
      %613 = vdwg.mxu0
      %v614 = vmax.f32 %v561, 0.0
      %v615 = vmax.f32 %v564, 0.0
      %v616 = vmax.f32 %v569, 0.0
      %v617 = vmax.f32 %v572, 0.0
      %v618 = vmax.f32 %v577, 0.0
      %v619 = vmax.f32 %v580, 0.0
      %v620 = vmax.f32 %v585, 0.0
      %v621 = vmax.f32 %v588, 0.0
      %v622 = vmax.f32 %v593, 0.0
      %v623 = vmax.f32 %v596, 0.0
      %v624 = vmax.f32 %v601, 0.0
      %v625 = vmax.f32 %v604, 0.0
      %v626 = vmax.f32 %v609, 0.0
      %v627 = vpack.c.bf16 %v615, %v614
      %v628 = vpack.c.bf16 %v617, %v616
      %v629 = vpack.c.bf16 %v619, %v618
      %v630 = vpack.c.bf16 %v621, %v620
      %v631 = vpack.c.bf16 %v623, %v622
      %v632 = vpack.c.bf16 %v625, %v624
      %v633 = vpack.c.bf16 %v626, %v626
      %v634 = vld [vmem:[%s4] sm:$0xff]
      %v635 = vld [vmem:[%s4 + $0x8] sm:$0xff]
      %v636 = vld [vmem:[%s4 + $0x10] sm:$0xff]
      %v637 = vld [vmem:[%s4 + $0x18] sm:$0xff]
      %v638 = vld [vmem:[%s4 + $0x20] sm:$0xff]
      %v639 = vld [vmem:[%s4 + $0x28] sm:$0xff]
      %v640 = vld [vmem:[%s4 + $0x30] sm:$0xff]
      %v641 = vld [vmem:[%s4 + $0x38] sm:$0xff]
      %v642 = vld [vmem:[%s4 + $0x40] sm:$0xff]
      %v643 = vld [vmem:[%s4 + $0x48] sm:$0xff]
      %v644 = vld [vmem:[%s4 + $0x50] sm:$0xff]
      %v645 = vld [vmem:[%s4 + $0x58] sm:$0xff]
      %v646 = vld [vmem:[%s4 + $0x60] sm:$0xff]
      %v647 = vld [vmem:[%s4 + $0x68] sm:$0xff]
      %v648 = vld [vmem:[%s4 + $0x70] sm:$0xff]
      %v649 = vld [vmem:[%s4 + $0x78] sm:$0xff]
      %v650 = vld [vmem:[%s4 + $0x80] sm:$0xff]
      %v651 = vld [vmem:[%s4 + $0x88] sm:$0xff]
      %v652 = vld [vmem:[%s4 + $0x90] sm:$0xff]
      %v653 = vld [vmem:[%s4 + $0x98] sm:$0xff]
      %v654 = vld [vmem:[%s4 + $0xa0] sm:$0xff]
      %v655 = vld [vmem:[%s4 + $0xa8] sm:$0xff]
      %v656 = vld [vmem:[%s4 + $0xb0] sm:$0xff]
      %v657 = vld [vmem:[%s4 + $0xb8] sm:$0xff]
      %v658 = vld [vmem:[%s4 + $0xc0] sm:$0xff]
      %v659 = vld [vmem:[%s4 + $0xc8] sm:$0xff]
      %v660 = vld [vmem:[%s4 + $0xd0] sm:$0xff]
      %v661 = vld [vmem:[%s4 + $0xd8] sm:$0xff]
      %v662 = vld [vmem:[%s4 + $0xe0] sm:$0xff]
      %v663 = vld [vmem:[%s4 + $0xe8] sm:$0xff]
      %v664 = vld [vmem:[%s4 + $0xf0] sm:$0xff]
      %v665 = vld [vmem:[%s4 + $0xf8] sm:$0xff]
      %v666 = vld [vmem:[%s4 + $0x100] sm:$0xff]
      %v667 = vld [vmem:[%s4 + $0x108] sm:$0xff]
      %v668 = vld [vmem:[%s4 + $0x110] sm:$0xff]
      %v669 = vld [vmem:[%s4 + $0x118] sm:$0xff]
      %v670 = vld [vmem:[%s4 + $0x120] sm:$0xff]
      %v671 = vld [vmem:[%s4 + $0x128] sm:$0xff]
      %v672 = vld [vmem:[%s4 + $0x130] sm:$0xff]
      %v673 = vld [vmem:[%s4 + $0x138] sm:$0xff]
      %v674 = vld [vmem:[%s4 + $0x140] sm:$0xff]
      %v675 = vld [vmem:[%s4 + $0x148] sm:$0xff]
      %v676 = vld [vmem:[%s4 + $0x150] sm:$0xff]
      %v677 = vld [vmem:[%s4 + $0x158] sm:$0xff]
      %v678 = vld [vmem:[%s4 + $0x160] sm:$0xff]
      %v679 = vld [vmem:[%s4 + $0x168] sm:$0xff]
      %v680 = vld [vmem:[%s4 + $0x170] sm:$0xff]
      %v681 = vld [vmem:[%s4 + $0x178] sm:$0xff]
      %v682 = vld [vmem:[%s5] sm:$0x3f]
      %v684 = vlaneseq
      %v685 = vshrl.u32 %v684, 7
      %v686 = vsub.s32 0, %v685
      %v687 = vrot.slane %v682, %v686
      %v688 = vlaneseq
      %v689 = vshrl.u32 %v688, 7
      %v690 = vsub.s32 1, %v689
      %v691 = vrot.slane %v682, %v690
      %v692 = vlaneseq
      %v693 = vshrl.u32 %v692, 7
      %v694 = vsub.s32 2, %v693
      %v695 = vrot.slane %v682, %v694
      %v696 = vlaneseq
      %v697 = vshrl.u32 %v696, 7
      %v698 = vsub.s32 3, %v697
      %v699 = vrot.slane %v682, %v698
      %v700 = vlaneseq
      %v701 = vshrl.u32 %v700, 7
      %v702 = vsub.s32 4, %v701
      %v703 = vrot.slane %v682, %v702
      %v704 = vlaneseq
      %v705 = vshrl.u32 %v704, 7
      %v706 = vsub.s32 5, %v705
      %v707 = vrot.slane %v682, %v706
      %v762 = vunpack.c.l.b16 %v634
      %v763 = vunpack.c.h.b16 %v634
      %v764 = vunpack.c.l.b16 %v635
      %v765 = vunpack.c.h.b16 %v635
      %v766 = vunpack.c.l.b16 %v636
      %v767 = vunpack.c.h.b16 %v636
      %v768 = vunpack.c.l.b16 %v637
      %v769 = vunpack.c.h.b16 %v637
      %v770 = vunpack.c.l.b16 %v638
      %v771 = vunpack.c.h.b16 %v638
      %v772 = vunpack.c.l.b16 %v639
      %v773 = vunpack.c.h.b16 %v639
      %v774 = vunpack.c.l.b16 %v640
      %v775 = vunpack.c.h.b16 %v640
      %v776 = vunpack.c.l.b16 %v641
      %v777 = vunpack.c.h.b16 %v641
      %v778 = vunpack.c.l.b16 %v642
      %v779 = vunpack.c.h.b16 %v642
      %v780 = vunpack.c.l.b16 %v643
      %v781 = vunpack.c.h.b16 %v643
      %v782 = vunpack.c.l.b16 %v644
      %v783 = vunpack.c.h.b16 %v644
      %v784 = vunpack.c.l.b16 %v645
      %v785 = vunpack.c.h.b16 %v645
      %v786 = vunpack.c.l.b16 %v646
      %v787 = vunpack.c.h.b16 %v646
      %v788 = vunpack.c.l.b16 %v647
      %v789 = vunpack.c.h.b16 %v647
      %v790 = vunpack.c.l.b16 %v648
      %v791 = vunpack.c.h.b16 %v648
      %v792 = vunpack.c.l.b16 %v649
      %v793 = vunpack.c.h.b16 %v649
      %v794 = vunpack.c.l.b16 %v650
      %v795 = vunpack.c.h.b16 %v650
      %v796 = vunpack.c.l.b16 %v651
      %v797 = vunpack.c.h.b16 %v651
      %v798 = vunpack.c.l.b16 %v652
      %v799 = vunpack.c.h.b16 %v652
      %v800 = vunpack.c.l.b16 %v653
      %v801 = vunpack.c.h.b16 %v653
      %v802 = vunpack.c.l.b16 %v654
      %v803 = vunpack.c.h.b16 %v654
      %v804 = vunpack.c.l.b16 %v655
      %v805 = vunpack.c.h.b16 %v655
      %v806 = vunpack.c.l.b16 %v656
      %v807 = vunpack.c.h.b16 %v656
      %v808 = vunpack.c.l.b16 %v657
      %v809 = vunpack.c.h.b16 %v657
      %v810 = vunpack.c.l.b16 %v658
      %v811 = vunpack.c.h.b16 %v658
      %v812 = vunpack.c.l.b16 %v659
      %v813 = vunpack.c.h.b16 %v659
      %v814 = vunpack.c.l.b16 %v660
      %v815 = vunpack.c.h.b16 %v660
      %v816 = vunpack.c.l.b16 %v661
      %v817 = vunpack.c.h.b16 %v661
      %v818 = vunpack.c.l.b16 %v662
      %v819 = vunpack.c.h.b16 %v662
      %v820 = vunpack.c.l.b16 %v663
      %v821 = vunpack.c.h.b16 %v663
      %v822 = vunpack.c.l.b16 %v664
      %v823 = vunpack.c.h.b16 %v664
      %v824 = vunpack.c.l.b16 %v665
      %v825 = vunpack.c.h.b16 %v665
      %v826 = vunpack.c.l.b16 %v666
      %v827 = vunpack.c.h.b16 %v666
      %v828 = vunpack.c.l.b16 %v667
      %v829 = vunpack.c.h.b16 %v667
      %v830 = vunpack.c.l.b16 %v668
      %v831 = vunpack.c.h.b16 %v668
      %v832 = vunpack.c.l.b16 %v669
      %v833 = vunpack.c.h.b16 %v669
      %v834 = vunpack.c.l.b16 %v670
      %v835 = vunpack.c.h.b16 %v670
      %v836 = vunpack.c.l.b16 %v671
      %v837 = vunpack.c.h.b16 %v671
      %v838 = vunpack.c.l.b16 %v672
      %v839 = vunpack.c.h.b16 %v672
      %v840 = vunpack.c.l.b16 %v673
      %v841 = vunpack.c.h.b16 %v673
      %v842 = vunpack.c.l.b16 %v674
      %v843 = vunpack.c.h.b16 %v674
      %v844 = vunpack.c.l.b16 %v675
      %v845 = vunpack.c.h.b16 %v675
      %v846 = vunpack.c.l.b16 %v676
      %v847 = vunpack.c.h.b16 %v676
      %v848 = vunpack.c.l.b16 %v677
      %v849 = vunpack.c.h.b16 %v677
      %v850 = vunpack.c.l.b16 %v678
      %v851 = vunpack.c.h.b16 %v678
      %v852 = vunpack.c.l.b16 %v679
      %v853 = vunpack.c.h.b16 %v679
      %v854 = vunpack.c.l.b16 %v680
      %v855 = vunpack.c.h.b16 %v680
      %v856 = vunpack.c.l.b16 %v681
      %v857 = vunpack.c.h.b16 %v681
      %v858 = vpack.c.b16 %v768, %v762
      %v859 = vpack.c.b16 %v769, %v763
      %v860 = vpack.c.b16 %v770, %v764
      %v861 = vpack.c.b16 %v771, %v765
      %v862 = vpack.c.b16 %v772, %v766
      %v863 = vpack.c.b16 %v773, %v767
      %v864 = vpack.c.b16 %v780, %v774
      %v865 = vpack.c.b16 %v781, %v775
      %v866 = vpack.c.b16 %v782, %v776
      %v867 = vpack.c.b16 %v783, %v777
      %v868 = vpack.c.b16 %v784, %v778
      %v869 = vpack.c.b16 %v785, %v779
      %v870 = vpack.c.b16 %v792, %v786
      %v871 = vpack.c.b16 %v793, %v787
      %v872 = vpack.c.b16 %v794, %v788
      %v873 = vpack.c.b16 %v795, %v789
      %v874 = vpack.c.b16 %v796, %v790
      %v875 = vpack.c.b16 %v797, %v791
      %v876 = vpack.c.b16 %v804, %v798
      %v877 = vpack.c.b16 %v805, %v799
      %v878 = vpack.c.b16 %v806, %v800
      %v879 = vpack.c.b16 %v807, %v801
      %v880 = vpack.c.b16 %v808, %v802
      %v881 = vpack.c.b16 %v809, %v803
      %v882 = vpack.c.b16 %v816, %v810
      %v883 = vpack.c.b16 %v817, %v811
      %v884 = vpack.c.b16 %v818, %v812
      %v885 = vpack.c.b16 %v819, %v813
      %v886 = vpack.c.b16 %v820, %v814
      %v887 = vpack.c.b16 %v821, %v815
      %v888 = vpack.c.b16 %v828, %v822
      %v889 = vpack.c.b16 %v829, %v823
      %v890 = vpack.c.b16 %v830, %v824
      %v891 = vpack.c.b16 %v831, %v825
      %v892 = vpack.c.b16 %v832, %v826
      %v893 = vpack.c.b16 %v833, %v827
      %v894 = vpack.c.b16 %v840, %v834
      %v895 = vpack.c.b16 %v841, %v835
      %v896 = vpack.c.b16 %v842, %v836
      %v897 = vpack.c.b16 %v843, %v837
      %v898 = vpack.c.b16 %v844, %v838
      %v899 = vpack.c.b16 %v845, %v839
      %v900 = vpack.c.b16 %v852, %v846
      %v901 = vpack.c.b16 %v853, %v847
      %v902 = vpack.c.b16 %v854, %v848
      %v903 = vpack.c.b16 %v855, %v849
      %v904 = vpack.c.b16 %v856, %v850
      %v905 = vpack.c.b16 %v857, %v851
      %954 = vmatprep.subr.bf16.mxu0 %v901
      %955 = vmatpush1.bf16.msra.mxu0 %v900
      %956 = vmatprep.subr.bf16.mxu0 %v895
      %957 = vmatpush1.bf16.msra.mxu0 %v894
      %958 = vmatprep.subr.bf16.mxu0 %v889
      %959 = vmatpush1.bf16.msra.mxu0 %v888
      %960 = vmatprep.subr.bf16.mxu0 %v883
      %961 = vmatpush1.bf16.msra.mxu0 %v882
      %962 = vmatprep.subr.bf16.mxu0 %v877
      %963 = vmatpush1.bf16.msra.mxu0 %v876
      %964 = vmatprep.subr.bf16.mxu0 %v871
      %965 = vmatpush1.bf16.msra.mxu0 %v870
      %966 = vmatprep.subr.bf16.mxu0 %v865
      %967 = vmatpush1.bf16.msra.mxu0 %v864
      %968 = vmatprep.subr.bf16.mxu0 %v859
      %969 = vmatpush1.bf16.msra.mxu0 %v858
      %970 = vmatprep.subr.bf16.mxu0 0
      %971 = vmatpush2.bf16.msra.mxu0 0
      %972 = vmatprep.subr.bf16.mxu0 0
      %973 = vmatpush2.bf16.msra.mxu0 0
      %974 = vmatprep.subr.bf16.mxu0 0
      %975 = vmatpush2.bf16.msra.mxu0 0
      %976 = vmatprep.subr.bf16.mxu0 0
      %977 = vmatpush2.bf16.msra.mxu0 0
      %978 = vmatprep.subr.bf16.mxu0 0
      %979 = vmatpush2.bf16.msra.mxu0 0
      %980 = vmatprep.subr.bf16.mxu0 0
      %981 = vmatpush2.bf16.msra.mxu0 0
      %982 = vmatprep.subr.bf16.mxu0 0
      %983 = vmatpush2.bf16.msra.mxu0 0
      %984 = vmatprep.subr.bf16.mxu0 0
      %985 = vmatpush2.bf16.msra.mxu0 0
      %986 = vmatprep.mubr.bf16.mxu0 0
      %987 = vmatmul.mubr.bf16.gmra.mxu0 %v627
      %v988 = vpop.f32.mrf.mxu0
      %v989 = vadd.f32 %v687, %v988
      %v990 = vpop.f32.mrf.mxu0
      %v991 = vadd.f32 %v691, %v990
      %v992 = vpop.f32.mrf.mxu0
      %v993 = vadd.f32 %v687, %v992
      %v994 = vpop.f32.mrf.mxu0
      %v995 = vadd.f32 %v691, %v994
      %996 = vmatprep.mubr.bf16.mxu0 0
      %997 = vmatmul.mubr.bf16.gmra.mxu0 %v628
      %v998 = vpop.f32.mrf.mxu0
      %v999 = vadd.f32 %v687, %v998
      %v1000 = vpop.f32.mrf.mxu0
      %v1001 = vadd.f32 %v691, %v1000
      %v1002 = vpop.f32.mrf.mxu0
      %v1003 = vadd.f32 %v687, %v1002
      %v1004 = vpop.f32.mrf.mxu0
      %v1005 = vadd.f32 %v691, %v1004
      %1006 = vmatprep.mubr.bf16.mxu0 0
      %1007 = vmatmul.mubr.bf16.gmra.mxu0 %v629
      %v1008 = vpop.f32.mrf.mxu0
      %v1009 = vadd.f32 %v687, %v1008
      %v1010 = vpop.f32.mrf.mxu0
      %v1011 = vadd.f32 %v691, %v1010
      %v1012 = vpop.f32.mrf.mxu0
      %v1013 = vadd.f32 %v687, %v1012
      %v1014 = vpop.f32.mrf.mxu0
      %v1015 = vadd.f32 %v691, %v1014
      %1016 = vmatprep.mubr.bf16.mxu0 0
      %1017 = vmatmul.mubr.bf16.gmra.mxu0 %v630
      %v1018 = vpop.f32.mrf.mxu0
      %v1019 = vadd.f32 %v687, %v1018
      %v1020 = vpop.f32.mrf.mxu0
      %v1021 = vadd.f32 %v691, %v1020
      %v1022 = vpop.f32.mrf.mxu0
      %v1023 = vadd.f32 %v687, %v1022
      %v1024 = vpop.f32.mrf.mxu0
      %v1025 = vadd.f32 %v691, %v1024
      %1026 = vmatprep.mubr.bf16.mxu0 0
      %1027 = vmatmul.mubr.bf16.gmra.mxu0 %v631
      %v1028 = vpop.f32.mrf.mxu0
      %v1029 = vadd.f32 %v687, %v1028
      %v1030 = vpop.f32.mrf.mxu0
      %v1031 = vadd.f32 %v691, %v1030
      %v1032 = vpop.f32.mrf.mxu0
      %v1033 = vadd.f32 %v687, %v1032
      %v1034 = vpop.f32.mrf.mxu0
      %v1035 = vadd.f32 %v691, %v1034
      %1036 = vmatprep.mubr.bf16.mxu0 0
      %1037 = vmatmul.mubr.bf16.gmra.mxu0 %v632
      %v1038 = vpop.f32.mrf.mxu0
      %v1039 = vadd.f32 %v687, %v1038
      %v1040 = vpop.f32.mrf.mxu0
      %v1041 = vadd.f32 %v691, %v1040
      %v1042 = vpop.f32.mrf.mxu0
      %v1043 = vadd.f32 %v687, %v1042
      %v1044 = vpop.f32.mrf.mxu0
      %v1045 = vadd.f32 %v691, %v1044
      %1046 = vmatprep.mubr.bf16.mxu0 0
      %1047 = vmatmul.mubr.bf16.gmra.mxu0 %v633
      %v1048 = vpop.f32.mrf.mxu0
      %v1049 = vadd.f32 %v687, %v1048
      %v1050 = vpop.f32.mrf.mxu0
      %v1051 = vadd.f32 %v691, %v1050
      %v1052 = vpop.f32.mrf.mxu0
      %v1053 = vpop.f32.mrf.mxu0
      %1054 = vdwg.mxu0
      %1055 = vmatprep.subr.bf16.mxu0 %v903
      %1056 = vmatpush1.bf16.msra.mxu0 %v902
      %1057 = vmatprep.subr.bf16.mxu0 %v897
      %1058 = vmatpush1.bf16.msra.mxu0 %v896
      %1059 = vmatprep.subr.bf16.mxu0 %v891
      %1060 = vmatpush1.bf16.msra.mxu0 %v890
      %1061 = vmatprep.subr.bf16.mxu0 %v885
      %1062 = vmatpush1.bf16.msra.mxu0 %v884
      %1063 = vmatprep.subr.bf16.mxu0 %v879
      %1064 = vmatpush1.bf16.msra.mxu0 %v878
      %1065 = vmatprep.subr.bf16.mxu0 %v873
      %1066 = vmatpush1.bf16.msra.mxu0 %v872
      %1067 = vmatprep.subr.bf16.mxu0 %v867
      %1068 = vmatpush1.bf16.msra.mxu0 %v866
      %1069 = vmatprep.subr.bf16.mxu0 %v861
      %1070 = vmatpush1.bf16.msra.mxu0 %v860
      %1071 = vmatprep.subr.bf16.mxu0 0
      %1072 = vmatpush2.bf16.msra.mxu0 0
      %1073 = vmatprep.subr.bf16.mxu0 0
      %1074 = vmatpush2.bf16.msra.mxu0 0
      %1075 = vmatprep.subr.bf16.mxu0 0
      %1076 = vmatpush2.bf16.msra.mxu0 0
      %1077 = vmatprep.subr.bf16.mxu0 0
      %1078 = vmatpush2.bf16.msra.mxu0 0
      %1079 = vmatprep.subr.bf16.mxu0 0
      %1080 = vmatpush2.bf16.msra.mxu0 0
      %1081 = vmatprep.subr.bf16.mxu0 0
      %1082 = vmatpush2.bf16.msra.mxu0 0
      %1083 = vmatprep.subr.bf16.mxu0 0
      %1084 = vmatpush2.bf16.msra.mxu0 0
      %1085 = vmatprep.subr.bf16.mxu0 0
      %1086 = vmatpush2.bf16.msra.mxu0 0
      %1087 = vmatprep.mubr.bf16.mxu0 0
      %1088 = vmatmul.mubr.bf16.gmra.mxu0 %v627
      %v1089 = vpop.f32.mrf.mxu0
      %v1090 = vadd.f32 %v695, %v1089
      %v1091 = vpop.f32.mrf.mxu0
      %v1092 = vadd.f32 %v699, %v1091
      %v1093 = vpop.f32.mrf.mxu0
      %v1094 = vadd.f32 %v695, %v1093
      %v1095 = vpop.f32.mrf.mxu0
      %v1096 = vadd.f32 %v699, %v1095
      %1097 = vmatprep.mubr.bf16.mxu0 0
      %1098 = vmatmul.mubr.bf16.gmra.mxu0 %v628
      %v1099 = vpop.f32.mrf.mxu0
      %v1100 = vadd.f32 %v695, %v1099
      %v1101 = vpop.f32.mrf.mxu0
      %v1102 = vadd.f32 %v699, %v1101
      %v1103 = vpop.f32.mrf.mxu0
      %v1104 = vadd.f32 %v695, %v1103
      %v1105 = vpop.f32.mrf.mxu0
      %v1106 = vadd.f32 %v699, %v1105
      %1107 = vmatprep.mubr.bf16.mxu0 0
      %1108 = vmatmul.mubr.bf16.gmra.mxu0 %v629
      %v1109 = vpop.f32.mrf.mxu0
      %v1110 = vadd.f32 %v695, %v1109
      %v1111 = vpop.f32.mrf.mxu0
      %v1112 = vadd.f32 %v699, %v1111
      %v1113 = vpop.f32.mrf.mxu0
      %v1114 = vadd.f32 %v695, %v1113
      %v1115 = vpop.f32.mrf.mxu0
      %v1116 = vadd.f32 %v699, %v1115
      %1117 = vmatprep.mubr.bf16.mxu0 0
      %1118 = vmatmul.mubr.bf16.gmra.mxu0 %v630
      %v1119 = vpop.f32.mrf.mxu0
      %v1120 = vadd.f32 %v695, %v1119
      %v1121 = vpop.f32.mrf.mxu0
      %v1122 = vadd.f32 %v699, %v1121
      %v1123 = vpop.f32.mrf.mxu0
      %v1124 = vadd.f32 %v695, %v1123
      %v1125 = vpop.f32.mrf.mxu0
      %v1126 = vadd.f32 %v699, %v1125
      %1127 = vmatprep.mubr.bf16.mxu0 0
      %1128 = vmatmul.mubr.bf16.gmra.mxu0 %v631
      %v1129 = vpop.f32.mrf.mxu0
      %v1130 = vadd.f32 %v695, %v1129
      %v1131 = vpop.f32.mrf.mxu0
      %v1132 = vadd.f32 %v699, %v1131
      %v1133 = vpop.f32.mrf.mxu0
      %v1134 = vadd.f32 %v695, %v1133
      %v1135 = vpop.f32.mrf.mxu0
      %v1136 = vadd.f32 %v699, %v1135
      %1137 = vmatprep.mubr.bf16.mxu0 0
      %1138 = vmatmul.mubr.bf16.gmra.mxu0 %v632
      %v1139 = vpop.f32.mrf.mxu0
      %v1140 = vadd.f32 %v695, %v1139
      %v1141 = vpop.f32.mrf.mxu0
      %v1142 = vadd.f32 %v699, %v1141
      %v1143 = vpop.f32.mrf.mxu0
      %v1144 = vadd.f32 %v695, %v1143
      %v1145 = vpop.f32.mrf.mxu0
      %v1146 = vadd.f32 %v699, %v1145
      %1147 = vmatprep.mubr.bf16.mxu0 0
      %1148 = vmatmul.mubr.bf16.gmra.mxu0 %v633
      %v1149 = vpop.f32.mrf.mxu0
      %v1150 = vadd.f32 %v695, %v1149
      %v1151 = vpop.f32.mrf.mxu0
      %v1152 = vadd.f32 %v699, %v1151
      %v1153 = vpop.f32.mrf.mxu0
      %v1154 = vpop.f32.mrf.mxu0
      %1155 = vdwg.mxu0
      %1156 = vmatprep.subr.bf16.mxu0 %v905
      %1157 = vmatpush1.bf16.msra.mxu0 %v904
      %1158 = vmatprep.subr.bf16.mxu0 %v899
      %1159 = vmatpush1.bf16.msra.mxu0 %v898
      %1160 = vmatprep.subr.bf16.mxu0 %v893
      %1161 = vmatpush1.bf16.msra.mxu0 %v892
      %1162 = vmatprep.subr.bf16.mxu0 %v887
      %1163 = vmatpush1.bf16.msra.mxu0 %v886
      %1164 = vmatprep.subr.bf16.mxu0 %v881
      %1165 = vmatpush1.bf16.msra.mxu0 %v880
      %1166 = vmatprep.subr.bf16.mxu0 %v875
      %1167 = vmatpush1.bf16.msra.mxu0 %v874
      %1168 = vmatprep.subr.bf16.mxu0 %v869
      %1169 = vmatpush1.bf16.msra.mxu0 %v868
      %1170 = vmatprep.subr.bf16.mxu0 %v863
      %1171 = vmatpush1.bf16.msra.mxu0 %v862
      %1172 = vmatprep.subr.bf16.mxu0 0
      %1173 = vmatpush2.bf16.msra.mxu0 0
      %1174 = vmatprep.subr.bf16.mxu0 0
      %1175 = vmatpush2.bf16.msra.mxu0 0
      %1176 = vmatprep.subr.bf16.mxu0 0
      %1177 = vmatpush2.bf16.msra.mxu0 0
      %1178 = vmatprep.subr.bf16.mxu0 0
      %1179 = vmatpush2.bf16.msra.mxu0 0
      %1180 = vmatprep.subr.bf16.mxu0 0
      %1181 = vmatpush2.bf16.msra.mxu0 0
      %1182 = vmatprep.subr.bf16.mxu0 0
      %1183 = vmatpush2.bf16.msra.mxu0 0
      %1184 = vmatprep.subr.bf16.mxu0 0
      %1185 = vmatpush2.bf16.msra.mxu0 0
      %1186 = vmatprep.subr.bf16.mxu0 0
      %1187 = vmatpush2.bf16.msra.mxu0 0
      %1188 = vmatprep.mubr.bf16.mxu0 0
      %1189 = vmatmul.mubr.bf16.gmra.mxu0 %v627
      %v1190 = vpop.f32.mrf.mxu0
      %v1191 = vadd.f32 %v703, %v1190
      %v1192 = vpop.f32.mrf.mxu0
      %v1193 = vadd.f32 %v707, %v1192
      %v1194 = vpop.f32.mrf.mxu0
      %v1195 = vadd.f32 %v703, %v1194
      %v1196 = vpop.f32.mrf.mxu0
      %v1197 = vadd.f32 %v707, %v1196
      %1198 = vmatprep.mubr.bf16.mxu0 0
      %1199 = vmatmul.mubr.bf16.gmra.mxu0 %v628
      %v1200 = vpop.f32.mrf.mxu0
      %v1201 = vadd.f32 %v703, %v1200
      %v1202 = vpop.f32.mrf.mxu0
      %v1203 = vadd.f32 %v707, %v1202
      %v1204 = vpop.f32.mrf.mxu0
      %v1205 = vadd.f32 %v703, %v1204
      %v1206 = vpop.f32.mrf.mxu0
      %v1207 = vadd.f32 %v707, %v1206
      %1208 = vmatprep.mubr.bf16.mxu0 0
      %1209 = vmatmul.mubr.bf16.gmra.mxu0 %v629
      %v1210 = vpop.f32.mrf.mxu0
      %v1211 = vadd.f32 %v703, %v1210
      %v1212 = vpop.f32.mrf.mxu0
      %v1213 = vadd.f32 %v707, %v1212
      %v1214 = vpop.f32.mrf.mxu0
      %v1215 = vadd.f32 %v703, %v1214
      %v1216 = vpop.f32.mrf.mxu0
      %v1217 = vadd.f32 %v707, %v1216
      %1218 = vmatprep.mubr.bf16.mxu0 0
      %1219 = vmatmul.mubr.bf16.gmra.mxu0 %v630
      %v1220 = vpop.f32.mrf.mxu0
      %v1221 = vadd.f32 %v703, %v1220
      %v1222 = vpop.f32.mrf.mxu0
      %v1223 = vadd.f32 %v707, %v1222
      %v1224 = vpop.f32.mrf.mxu0
      %v1225 = vadd.f32 %v703, %v1224
      %v1226 = vpop.f32.mrf.mxu0
      %v1227 = vadd.f32 %v707, %v1226
      %1228 = vmatprep.mubr.bf16.mxu0 0
      %1229 = vmatmul.mubr.bf16.gmra.mxu0 %v631
      %v1230 = vpop.f32.mrf.mxu0
      %v1231 = vadd.f32 %v703, %v1230
      %v1232 = vpop.f32.mrf.mxu0
      %v1233 = vadd.f32 %v707, %v1232
      %v1234 = vpop.f32.mrf.mxu0
      %v1235 = vadd.f32 %v703, %v1234
      %v1236 = vpop.f32.mrf.mxu0
      %v1237 = vadd.f32 %v707, %v1236
      %1238 = vmatprep.mubr.bf16.mxu0 0
      %1239 = vmatmul.mubr.bf16.gmra.mxu0 %v632
      %v1240 = vpop.f32.mrf.mxu0
      %v1241 = vadd.f32 %v703, %v1240
      %v1242 = vpop.f32.mrf.mxu0
      %v1243 = vadd.f32 %v707, %v1242
      %v1244 = vpop.f32.mrf.mxu0
      %v1245 = vadd.f32 %v703, %v1244
      %v1246 = vpop.f32.mrf.mxu0
      %v1247 = vadd.f32 %v707, %v1246
      %1248 = vmatprep.mubr.bf16.mxu0 0
      %1249 = vmatmul.mubr.bf16.gmra.mxu0 %v633
      %v1250 = vpop.f32.mrf.mxu0
      %v1251 = vadd.f32 %v703, %v1250
      %v1252 = vpop.f32.mrf.mxu0
      %v1253 = vadd.f32 %v707, %v1252
      %v1254 = vpop.f32.mrf.mxu0
      %v1255 = vpop.f32.mrf.mxu0
      %1256 = vdwg.mxu0
      %v1257 = vmax.f32 %v989, %v991
      %1258 = vmax.xlane.f32.xlu0 %v1257
      %v1259 = vpop.xlane.xlu0 %1258
      %v1260 = vmax.f32 %v993, %v995
      %1261 = vmax.xlane.f32.xlu0 %v1260
      %v1262 = vpop.xlane.xlu0 %1261
      %v1263 = vmax.f32 %v999, %v1001
      %1264 = vmax.xlane.f32.xlu0 %v1263
      %v1265 = vpop.xlane.xlu0 %1264
      %v1266 = vmax.f32 %v1003, %v1005
      %1267 = vmax.xlane.f32.xlu0 %v1266
      %v1268 = vpop.xlane.xlu0 %1267
      %v1269 = vmax.f32 %v1009, %v1011
      %1270 = vmax.xlane.f32.xlu0 %v1269
      %v1271 = vpop.xlane.xlu0 %1270
      %v1272 = vmax.f32 %v1013, %v1015
      %1273 = vmax.xlane.f32.xlu0 %v1272
      %v1274 = vpop.xlane.xlu0 %1273
      %v1275 = vmax.f32 %v1019, %v1021
      %1276 = vmax.xlane.f32.xlu0 %v1275
      %v1277 = vpop.xlane.xlu0 %1276
      %v1278 = vmax.f32 %v1023, %v1025
      %1279 = vmax.xlane.f32.xlu0 %v1278
      %v1280 = vpop.xlane.xlu0 %1279
      %v1281 = vmax.f32 %v1029, %v1031
      %1282 = vmax.xlane.f32.xlu0 %v1281
      %v1283 = vpop.xlane.xlu0 %1282
      %v1284 = vmax.f32 %v1033, %v1035
      %1285 = vmax.xlane.f32.xlu0 %v1284
      %v1286 = vpop.xlane.xlu0 %1285
      %v1287 = vmax.f32 %v1039, %v1041
      %1288 = vmax.xlane.f32.xlu0 %v1287
      %v1289 = vpop.xlane.xlu0 %1288
      %v1290 = vmax.f32 %v1043, %v1045
      %1291 = vmax.xlane.f32.xlu0 %v1290
      %v1292 = vpop.xlane.xlu0 %1291
      %v1293 = vmax.f32 %v1049, %v1051
      %1294 = vmax.xlane.f32.xlu0 %v1293
      %v1295 = vpop.xlane.xlu0 %1294
      %v1296 = vsub.f32 %v989, %v1259
      %v1297 = vsub.f32 %v991, %v1259
      %v1298 = vsub.f32 %v993, %v1262
      %v1299 = vsub.f32 %v995, %v1262
      %v1300 = vsub.f32 %v999, %v1265
      %v1301 = vsub.f32 %v1001, %v1265
      %v1302 = vsub.f32 %v1003, %v1268
      %v1303 = vsub.f32 %v1005, %v1268
      %v1304 = vsub.f32 %v1009, %v1271
      %v1305 = vsub.f32 %v1011, %v1271
      %v1306 = vsub.f32 %v1013, %v1274
      %v1307 = vsub.f32 %v1015, %v1274
      %v1308 = vsub.f32 %v1019, %v1277
      %v1309 = vsub.f32 %v1021, %v1277
      %v1310 = vsub.f32 %v1023, %v1280
      %v1311 = vsub.f32 %v1025, %v1280
      %v1312 = vsub.f32 %v1029, %v1283
      %v1313 = vsub.f32 %v1031, %v1283
      %v1314 = vsub.f32 %v1033, %v1286
      %v1315 = vsub.f32 %v1035, %v1286
      %v1316 = vsub.f32 %v1039, %v1289
      %v1317 = vsub.f32 %v1041, %v1289
      %v1318 = vsub.f32 %v1043, %v1292
      %v1319 = vsub.f32 %v1045, %v1292
      %v1320 = vsub.f32 %v1049, %v1295
      %v1321 = vsub.f32 %v1051, %v1295
      %v1322 = vmul.f32 %v1296, 1.442695
      %v1323 = vpow.pop %v1322
      %v1324 = vmul.f32 %v1297, 1.442695
      %v1325 = vpow.pop %v1324
      %v1326 = vmul.f32 %v1298, 1.442695
      %v1327 = vpow.pop %v1326
      %v1328 = vmul.f32 %v1299, 1.442695
      %v1329 = vpow.pop %v1328
      %v1330 = vmul.f32 %v1300, 1.442695
      %v1331 = vpow.pop %v1330
      %v1332 = vmul.f32 %v1301, 1.442695
      %v1333 = vpow.pop %v1332
      %v1334 = vmul.f32 %v1302, 1.442695
      %v1335 = vpow.pop %v1334
      %v1336 = vmul.f32 %v1303, 1.442695
      %v1337 = vpow.pop %v1336
      %v1338 = vmul.f32 %v1304, 1.442695
      %v1339 = vpow.pop %v1338
      %v1340 = vmul.f32 %v1305, 1.442695
      %v1341 = vpow.pop %v1340
      %v1342 = vmul.f32 %v1306, 1.442695
      %v1343 = vpow.pop %v1342
      %v1344 = vmul.f32 %v1307, 1.442695
      %v1345 = vpow.pop %v1344
      %v1346 = vmul.f32 %v1308, 1.442695
      %v1347 = vpow.pop %v1346
      %v1348 = vmul.f32 %v1309, 1.442695
      %v1349 = vpow.pop %v1348
      %v1350 = vmul.f32 %v1310, 1.442695
      %v1351 = vpow.pop %v1350
      %v1352 = vmul.f32 %v1311, 1.442695
      %v1353 = vpow.pop %v1352
      %v1354 = vmul.f32 %v1312, 1.442695
      %v1355 = vpow.pop %v1354
      %v1356 = vmul.f32 %v1313, 1.442695
      %v1357 = vpow.pop %v1356
      %v1358 = vmul.f32 %v1314, 1.442695
      %v1359 = vpow.pop %v1358
      %v1360 = vmul.f32 %v1315, 1.442695
      %v1361 = vpow.pop %v1360
      %v1362 = vmul.f32 %v1316, 1.442695
      %v1363 = vpow.pop %v1362
      %v1364 = vmul.f32 %v1317, 1.442695
      %v1365 = vpow.pop %v1364
      %v1366 = vmul.f32 %v1318, 1.442695
      %v1367 = vpow.pop %v1366
      %v1368 = vmul.f32 %v1319, 1.442695
      %v1369 = vpow.pop %v1368
      %v1370 = vmul.f32 %v1320, 1.442695
      %v1371 = vpow.pop %v1370
      %v1372 = vmul.f32 %v1321, 1.442695
      %v1373 = vpow.pop %v1372
      %v1374 = vadd.f32 %v1323, %v1325
      %1375 = vadd.xlane.f32.xlu0 %v1374
      %v1376 = vpop.xlane.xlu0 %1375
      %v1377 = vadd.f32 %v1327, %v1329
      %1378 = vadd.xlane.f32.xlu0 %v1377
      %v1379 = vpop.xlane.xlu0 %1378
      %v1380 = vadd.f32 %v1331, %v1333
      %1381 = vadd.xlane.f32.xlu0 %v1380
      %v1382 = vpop.xlane.xlu0 %1381
      %v1383 = vadd.f32 %v1335, %v1337
      %1384 = vadd.xlane.f32.xlu0 %v1383
      %v1385 = vpop.xlane.xlu0 %1384
      %v1386 = vadd.f32 %v1339, %v1341
      %1387 = vadd.xlane.f32.xlu0 %v1386
      %v1388 = vpop.xlane.xlu0 %1387
      %v1389 = vadd.f32 %v1343, %v1345
      %1390 = vadd.xlane.f32.xlu0 %v1389
      %v1391 = vpop.xlane.xlu0 %1390
      %v1392 = vadd.f32 %v1347, %v1349
      %1393 = vadd.xlane.f32.xlu0 %v1392
      %v1394 = vpop.xlane.xlu0 %1393
      %v1395 = vadd.f32 %v1351, %v1353
      %1396 = vadd.xlane.f32.xlu0 %v1395
      %v1397 = vpop.xlane.xlu0 %1396
      %v1398 = vadd.f32 %v1355, %v1357
      %1399 = vadd.xlane.f32.xlu0 %v1398
      %v1400 = vpop.xlane.xlu0 %1399
      %v1401 = vadd.f32 %v1359, %v1361
      %1402 = vadd.xlane.f32.xlu0 %v1401
      %v1403 = vpop.xlane.xlu0 %1402
      %v1404 = vadd.f32 %v1363, %v1365
      %1405 = vadd.xlane.f32.xlu0 %v1404
      %v1406 = vpop.xlane.xlu0 %1405
      %v1407 = vadd.f32 %v1367, %v1369
      %1408 = vadd.xlane.f32.xlu0 %v1407
      %v1409 = vpop.xlane.xlu0 %1408
      %v1410 = vadd.f32 %v1371, %v1373
      %1411 = vadd.xlane.f32.xlu0 %v1410
      %v1412 = vpop.xlane.xlu0 %1411
      %v1413 = vrcp.pop %v1376
      %v1414 = vrcp.pop %v1379
      %v1415 = vrcp.pop %v1382
      %v1416 = vrcp.pop %v1385
      %v1417 = vrcp.pop %v1388
      %v1418 = vrcp.pop %v1391
      %v1419 = vrcp.pop %v1394
      %v1420 = vrcp.pop %v1397
      %v1421 = vrcp.pop %v1400
      %v1422 = vrcp.pop %v1403
      %v1423 = vrcp.pop %v1406
      %v1424 = vrcp.pop %v1409
      %v1425 = vrcp.pop %v1412
      %v1426 = vmul.f32 %v1323, %v1413
      %v1427 = vmul.f32 %v1325, %v1413
      %v1428 = vmul.f32 %v1327, %v1414
      %v1429 = vmul.f32 %v1329, %v1414
      %v1430 = vmul.f32 %v1331, %v1415
      %v1431 = vmul.f32 %v1333, %v1415
      %v1432 = vmul.f32 %v1335, %v1416
      %v1433 = vmul.f32 %v1337, %v1416
      %v1434 = vmul.f32 %v1339, %v1417
      %v1435 = vmul.f32 %v1341, %v1417
      %v1436 = vmul.f32 %v1343, %v1418
      %v1437 = vmul.f32 %v1345, %v1418
      %v1438 = vmul.f32 %v1347, %v1419
      %v1439 = vmul.f32 %v1349, %v1419
      %v1440 = vmul.f32 %v1351, %v1420
      %v1441 = vmul.f32 %v1353, %v1420
      %v1442 = vmul.f32 %v1355, %v1421
      %v1443 = vmul.f32 %v1357, %v1421
      %v1444 = vmul.f32 %v1359, %v1422
      %v1445 = vmul.f32 %v1361, %v1422
      %v1446 = vmul.f32 %v1363, %v1423
      %v1447 = vmul.f32 %v1365, %v1423
      %v1448 = vmul.f32 %v1367, %v1424
      %v1449 = vmul.f32 %v1369, %v1424
      %v1450 = vmul.f32 %v1371, %v1425
      %v1451 = vmul.f32 %v1373, %v1425
      %1452 = vst [vmem:[%s405] sm:$0xff] %v1426
      %1453 = vst [vmem:[%s405 + $0x8] sm:$0xff] %v1427
      %1454 = vst [vmem:[%s405 + $0x10] sm:$0xff] %v1428
      %1455 = vst [vmem:[%s405 + $0x18] sm:$0xff] %v1429
      %1456 = vst [vmem:[%s405 + $0x20] sm:$0xff] %v1430
      %1457 = vst [vmem:[%s405 + $0x28] sm:$0xff] %v1431
      %1458 = vst [vmem:[%s405 + $0x30] sm:$0xff] %v1432
      %1459 = vst [vmem:[%s405 + $0x38] sm:$0xff] %v1433
      %1460 = vst [vmem:[%s405 + $0x40] sm:$0xff] %v1434
      %1461 = vst [vmem:[%s405 + $0x48] sm:$0xff] %v1435
      %1462 = vst [vmem:[%s405 + $0x50] sm:$0xff] %v1436
      %1463 = vst [vmem:[%s405 + $0x58] sm:$0xff] %v1437
      %1464 = vst [vmem:[%s405 + $0x60] sm:$0xff] %v1438
      %1465 = vst [vmem:[%s405 + $0x68] sm:$0xff] %v1439
      %1466 = vst [vmem:[%s405 + $0x70] sm:$0xff] %v1440
      %1467 = vst [vmem:[%s405 + $0x78] sm:$0xff] %v1441
      %1468 = vst [vmem:[%s405 + $0x80] sm:$0xff] %v1442
      %1469 = vst [vmem:[%s405 + $0x88] sm:$0xff] %v1443
      %1470 = vst [vmem:[%s405 + $0x90] sm:$0xff] %v1444
      %1471 = vst [vmem:[%s405 + $0x98] sm:$0xff] %v1445
      %1472 = vst [vmem:[%s405 + $0xa0] sm:$0xff] %v1446
      %1473 = vst [vmem:[%s405 + $0xa8] sm:$0xff] %v1447
      %1474 = vst [vmem:[%s405 + $0xb0] sm:$0xff] %v1448
      %1475 = vst [vmem:[%s405 + $0xb8] sm:$0xff] %v1449
      %1476 = vst [vmem:[%s405 + $0xc0] sm:$0xff] %v1450
      %1477 = vst [vmem:[%s405 + $0xc8] sm:$0xff] %v1451
      %v1478 = vld [vmem:[%s398] sm:$0xff]
      %v1479 = vld [vmem:[%s398 + $0x8] sm:$0xff]
      %v1480 = vld [vmem:[%s398 + $0x10] sm:$0xff]
      %v1481 = vld [vmem:[%s398 + $0x18] sm:$0xff]
      %v1482 = vld [vmem:[%s398 + $0x20] sm:$0xff]
      %v1483 = vld [vmem:[%s398 + $0x28] sm:$0xff]
      %v1484 = vld [vmem:[%s398 + $0x30] sm:$0xff]
      %v1485 = vld [vmem:[%s398 + $0x38] sm:$0xff]
      %v1486 = vld [vmem:[%s398 + $0x40] sm:$0xff]
      %v1487 = vld [vmem:[%s398 + $0x48] sm:$0xff]
      %v1488 = vld [vmem:[%s398 + $0x50] sm:$0xff]
      %v1489 = vld [vmem:[%s398 + $0x58] sm:$0xff]
      %v1490 = vld [vmem:[%s398 + $0x60] sm:$0xff]
      %v1491 = vmul.f32 %v1478, 1.442695
      %v1492 = vpow.pop %v1491
      %v1493 = vmul.f32 %v1479, 1.442695
      %v1494 = vpow.pop %v1493
      %v1495 = vmul.f32 %v1480, 1.442695
      %v1496 = vpow.pop %v1495
      %v1497 = vmul.f32 %v1481, 1.442695
      %v1498 = vpow.pop %v1497
      %v1499 = vmul.f32 %v1482, 1.442695
      %v1500 = vpow.pop %v1499
      %v1501 = vmul.f32 %v1483, 1.442695
      %v1502 = vpow.pop %v1501
      %v1503 = vmul.f32 %v1484, 1.442695
      %v1504 = vpow.pop %v1503
      %v1505 = vmul.f32 %v1485, 1.442695
      %v1506 = vpow.pop %v1505
      %v1507 = vmul.f32 %v1486, 1.442695
      %v1508 = vpow.pop %v1507
      %v1509 = vmul.f32 %v1487, 1.442695
      %v1510 = vpow.pop %v1509
      %v1511 = vmul.f32 %v1488, 1.442695
      %v1512 = vpow.pop %v1511
      %v1513 = vmul.f32 %v1489, 1.442695
      %v1514 = vpow.pop %v1513
      %v1515 = vmul.f32 %v1490, 1.442695
      %v1516 = vpow.pop %v1515
      %1518 = vset.pattern.permute.xlu0 0
      %1519 = vperm.xlu0 %1518, %v1492
      %v1520 = vpop.permute.xlu0 %1519
      %1523 = vset.pattern.permute.xlu0 0
      %1524 = vperm.xlu0 %1523, %v1494
      %v1525 = vpop.permute.xlu0 %1524
      %1528 = vset.pattern.permute.xlu0 0
      %1529 = vperm.xlu0 %1528, %v1496
      %v1530 = vpop.permute.xlu0 %1529
      %1533 = vset.pattern.permute.xlu0 0
      %1534 = vperm.xlu0 %1533, %v1498
      %v1535 = vpop.permute.xlu0 %1534
      %1538 = vset.pattern.permute.xlu0 0
      %1539 = vperm.xlu0 %1538, %v1500
      %v1540 = vpop.permute.xlu0 %1539
      %1543 = vset.pattern.permute.xlu0 0
      %1544 = vperm.xlu0 %1543, %v1502
      %v1545 = vpop.permute.xlu0 %1544
      %1548 = vset.pattern.permute.xlu0 0
      %1549 = vperm.xlu0 %1548, %v1504
      %v1550 = vpop.permute.xlu0 %1549
      %1553 = vset.pattern.permute.xlu0 0
      %1554 = vperm.xlu0 %1553, %v1506
      %v1555 = vpop.permute.xlu0 %1554
      %1558 = vset.pattern.permute.xlu0 0
      %1559 = vperm.xlu0 %1558, %v1508
      %v1560 = vpop.permute.xlu0 %1559
      %1563 = vset.pattern.permute.xlu0 0
      %1564 = vperm.xlu0 %1563, %v1510
      %v1565 = vpop.permute.xlu0 %1564
      %1568 = vset.pattern.permute.xlu0 0
      %1569 = vperm.xlu0 %1568, %v1512
      %v1570 = vpop.permute.xlu0 %1569
      %1573 = vset.pattern.permute.xlu0 0
      %1574 = vperm.xlu0 %1573, %v1514
      %v1575 = vpop.permute.xlu0 %1574
      %1578 = vset.pattern.permute.xlu0 0
      %1579 = vperm.xlu0 %1578, %v1516
      %v1580 = vpop.permute.xlu0 %1579
      %v1582 = vmul.f32 %v1520, %v1426
      %v1583 = vmul.f32 %v1520, %v1427
      %v1584 = vmul.f32 %v1525, %v1428
      %v1585 = vmul.f32 %v1525, %v1429
      %v1586 = vmul.f32 %v1530, %v1430
      %v1587 = vmul.f32 %v1530, %v1431
      %v1588 = vmul.f32 %v1535, %v1432
      %v1589 = vmul.f32 %v1535, %v1433
      %v1590 = vmul.f32 %v1540, %v1434
      %v1591 = vmul.f32 %v1540, %v1435
      %v1592 = vmul.f32 %v1545, %v1436
      %v1593 = vmul.f32 %v1545, %v1437
      %v1594 = vmul.f32 %v1550, %v1438
      %v1595 = vmul.f32 %v1550, %v1439
      %v1596 = vmul.f32 %v1555, %v1440
      %v1597 = vmul.f32 %v1555, %v1441
      %v1598 = vmul.f32 %v1560, %v1442
      %v1599 = vmul.f32 %v1560, %v1443
      %v1600 = vmul.f32 %v1565, %v1444
      %v1601 = vmul.f32 %v1565, %v1445
      %v1602 = vmul.f32 %v1570, %v1446
      %v1603 = vmul.f32 %v1570, %v1447
      %v1604 = vmul.f32 %v1575, %v1448
      %v1605 = vmul.f32 %v1575, %v1449
      %v1606 = vmul.f32 %v1580, %v1450
      %v1607 = vmul.f32 %v1580, %v1451
      %1608 = vst [vmem:[%s419] sm:$0xff] %v1582
      %1609 = vst [vmem:[%s419 + $0x8] sm:$0xff] %v1583
      %1610 = vst [vmem:[%s419 + $0x10] sm:$0xff] %v1584
      %1611 = vst [vmem:[%s419 + $0x18] sm:$0xff] %v1585
      %1612 = vst [vmem:[%s419 + $0x20] sm:$0xff] %v1586
      %1613 = vst [vmem:[%s419 + $0x28] sm:$0xff] %v1587
      %1614 = vst [vmem:[%s419 + $0x30] sm:$0xff] %v1588
      %1615 = vst [vmem:[%s419 + $0x38] sm:$0xff] %v1589
      %1616 = vst [vmem:[%s419 + $0x40] sm:$0xff] %v1590
      %1617 = vst [vmem:[%s419 + $0x48] sm:$0xff] %v1591
      %1618 = vst [vmem:[%s419 + $0x50] sm:$0xff] %v1592
      %1619 = vst [vmem:[%s419 + $0x58] sm:$0xff] %v1593
      %1620 = vst [vmem:[%s419 + $0x60] sm:$0xff] %v1594
      %1621 = vst [vmem:[%s419 + $0x68] sm:$0xff] %v1595
      %1622 = vst [vmem:[%s419 + $0x70] sm:$0xff] %v1596
      %1623 = vst [vmem:[%s419 + $0x78] sm:$0xff] %v1597
      %1624 = vst [vmem:[%s419 + $0x80] sm:$0xff] %v1598
      %1625 = vst [vmem:[%s419 + $0x88] sm:$0xff] %v1599
      %1626 = vst [vmem:[%s419 + $0x90] sm:$0xff] %v1600
      %1627 = vst [vmem:[%s419 + $0x98] sm:$0xff] %v1601
      %1628 = vst [vmem:[%s419 + $0xa0] sm:$0xff] %v1602
      %1629 = vst [vmem:[%s419 + $0xa8] sm:$0xff] %v1603
      %1630 = vst [vmem:[%s419 + $0xb0] sm:$0xff] %v1604
      %1631 = vst [vmem:[%s419 + $0xb8] sm:$0xff] %v1605
      %1632 = vst [vmem:[%s419 + $0xc0] sm:$0xff] %v1606
      %1633 = vst [vmem:[%s419 + $0xc8] sm:$0xff] %v1607
      %1634 = vst [vmem:[%s412] sm:$0xff] %v1090
      %1635 = vst [vmem:[%s412 + $0x8] sm:$0xff] %v1092
      %1636 = vst [vmem:[%s412 + $0x10] sm:$0xff] %v1094
      %1637 = vst [vmem:[%s412 + $0x18] sm:$0xff] %v1096
      %1638 = vst [vmem:[%s412 + $0x20] sm:$0xff] %v1100
      %1639 = vst [vmem:[%s412 + $0x28] sm:$0xff] %v1102
      %1640 = vst [vmem:[%s412 + $0x30] sm:$0xff] %v1104
      %1641 = vst [vmem:[%s412 + $0x38] sm:$0xff] %v1106
      %1642 = vst [vmem:[%s412 + $0x40] sm:$0xff] %v1110
      %1643 = vst [vmem:[%s412 + $0x48] sm:$0xff] %v1112
      %1644 = vst [vmem:[%s412 + $0x50] sm:$0xff] %v1114
      %1645 = vst [vmem:[%s412 + $0x58] sm:$0xff] %v1116
      %1646 = vst [vmem:[%s412 + $0x60] sm:$0xff] %v1120
      %1647 = vst [vmem:[%s412 + $0x68] sm:$0xff] %v1122
      %1648 = vst [vmem:[%s412 + $0x70] sm:$0xff] %v1124
      %1649 = vst [vmem:[%s412 + $0x78] sm:$0xff] %v1126
      %1650 = vst [vmem:[%s412 + $0x80] sm:$0xff] %v1130
      %1651 = vst [vmem:[%s412 + $0x88] sm:$0xff] %v1132
      %1652 = vst [vmem:[%s412 + $0x90] sm:$0xff] %v1134
      %1653 = vst [vmem:[%s412 + $0x98] sm:$0xff] %v1136
      %1654 = vst [vmem:[%s412 + $0xa0] sm:$0xff] %v1140
      %1655 = vst [vmem:[%s412 + $0xa8] sm:$0xff] %v1142
      %1656 = vst [vmem:[%s412 + $0xb0] sm:$0xff] %v1144
      %1657 = vst [vmem:[%s412 + $0xb8] sm:$0xff] %v1146
      %1658 = vst [vmem:[%s412 + $0xc0] sm:$0xff] %v1150
      %1659 = vst [vmem:[%s412 + $0xc8] sm:$0xff] %v1152
      %1660 = vst [vmem:[%s426] sm:$0xff] %v1191
      %1661 = vst [vmem:[%s426 + $0x8] sm:$0xff] %v1193
      %1662 = vst [vmem:[%s426 + $0x10] sm:$0xff] %v1195
      %1663 = vst [vmem:[%s426 + $0x18] sm:$0xff] %v1197
      %1664 = vst [vmem:[%s426 + $0x20] sm:$0xff] %v1201
      %1665 = vst [vmem:[%s426 + $0x28] sm:$0xff] %v1203
      %1666 = vst [vmem:[%s426 + $0x30] sm:$0xff] %v1205
      %1667 = vst [vmem:[%s426 + $0x38] sm:$0xff] %v1207
      %1668 = vst [vmem:[%s426 + $0x40] sm:$0xff] %v1211
      %1669 = vst [vmem:[%s426 + $0x48] sm:$0xff] %v1213
      %1670 = vst [vmem:[%s426 + $0x50] sm:$0xff] %v1215
      %1671 = vst [vmem:[%s426 + $0x58] sm:$0xff] %v1217
      %1672 = vst [vmem:[%s426 + $0x60] sm:$0xff] %v1221
      %1673 = vst [vmem:[%s426 + $0x68] sm:$0xff] %v1223
      %1674 = vst [vmem:[%s426 + $0x70] sm:$0xff] %v1225
      %1675 = vst [vmem:[%s426 + $0x78] sm:$0xff] %v1227
      %1676 = vst [vmem:[%s426 + $0x80] sm:$0xff] %v1231
      %1677 = vst [vmem:[%s426 + $0x88] sm:$0xff] %v1233
      %1678 = vst [vmem:[%s426 + $0x90] sm:$0xff] %v1235
      %1679 = vst [vmem:[%s426 + $0x98] sm:$0xff] %v1237
      %1680 = vst [vmem:[%s426 + $0xa0] sm:$0xff] %v1241
      %1681 = vst [vmem:[%s426 + $0xa8] sm:$0xff] %v1243
      %1682 = vst [vmem:[%s426 + $0xb0] sm:$0xff] %v1245
      %1683 = vst [vmem:[%s426 + $0xb8] sm:$0xff] %v1247
      %1684 = vst [vmem:[%s426 + $0xc0] sm:$0xff] %v1251
      %1685 = vst [vmem:[%s426 + $0xc8] sm:$0xff] %v1253
      %s1686 = smul.u32 13, %s21
      %p1687 = scmp.lt.s32.totalorder %s1686, 25
      %s1688 = scalar_select %p1687, %s1686, 25
      %s1689 = smul.addr %s1688, 2
      %s1690 = smul.addr %s1689, 8
      %s1691 = scalar_lea.vmem %s6, %s1690
      %s1692 = smul.u32 13, %s21
      %p1693 = scmp.lt.s32.totalorder %s1692, 25
      %s1694 = scalar_select %p1693, %s1692, 25
      %s1695 = smul.addr %s1694, 2
      %s1696 = smul.addr %s1695, 8
      %s1697 = scalar_lea.vmem %s7, %s1696
      %s1698 = smul.u32 13, %s21
      %p1699 = scmp.lt.s32.totalorder %s1698, 25
      %s1700 = scalar_select %p1699, %s1698, 25
      %s1701 = smul.addr %s1700, 2
      %s1702 = smul.addr %s1701, 8
      %s1703 = scalar_lea.vmem %s8, %s1702
      %s1704 = smul.u32 13, %s21
      %p1705 = scmp.lt.s32.totalorder %s1704, 25
      %s1706 = scalar_select %p1705, %s1704, 25
      %s1707 = smul.addr %s1706, 2
      %s1708 = smul.addr %s1707, 8
      %s1709 = scalar_lea.vmem %s9, %s1708
      // Predicated region
      $region45: #{decoder_scvi_forward.1} parent=43 // pred_check
        %p1710 = pneg %p180
      $region46: #{decoder_scvi_forward.1} parent=43 // pred_check_branch
        %1712 = sbr.rel (%p1710) target = $region48
      $region47: #{decoder_scvi_forward.1} parent=43 // pred_region
        %s1713 = smul.u32 13, %s21
      $region48: #{decoder_scvi_forward.1} parent=43 // pred_fallthru
        _
      // Predicated region
      $region49: #{decoder_scvi_forward.1} parent=43 // pred_check
        %p1714 = pneg %p206
      $region50: #{decoder_scvi_forward.1} parent=43 // pred_check_branch
        %1716 = sbr.rel (%p1714) target = $region52
      $region51: #{decoder_scvi_forward.1} parent=43 // pred_region
        %s1717 = smul.u32 13, %s21
      $region52: #{decoder_scvi_forward.1} parent=43 // pred_fallthru
        _
      // Predicated region
      $region53: #{decoder_scvi_forward.1} parent=43 // pred_check
        %p1718 = pneg %p232
      $region54: #{decoder_scvi_forward.1} parent=43 // pred_check_branch
        %1720 = sbr.rel (%p1718) target = $region56
      $region55: #{decoder_scvi_forward.1} parent=43 // pred_region
        %s1721 = smul.u32 13, %s21
      $region56: #{decoder_scvi_forward.1} parent=43 // pred_fallthru
        _
      // Predicated region
      $region57: #{decoder_scvi_forward.1} parent=43 // pred_check
        %p1722 = pneg %p258
      $region58: #{decoder_scvi_forward.1} parent=43 // pred_check_branch
        %1724 = sbr.rel (%p1722) target = $region60
      $region59: #{decoder_scvi_forward.1} parent=43 // pred_region
        %s1725 = smul.u32 13, %s21
      $region60: #{decoder_scvi_forward.1} parent=43 // pred_fallthru
        _
    $region44: #{decoder_scvi_forward.1} parent=5 // pred_fallthru
      _
    %p1726 = scmp.le.s32.totalorder 2, %s16
    // Predicated region
    $region61: #{decoder_scvi_forward.1} parent=5 // pred_check
      %p1727 = pneg %p1726
    $region62: #{decoder_scvi_forward.1} parent=5 // pred_check_branch
      %1729 = sbr.rel (%p1727) target = $region64
    $region63: #{decoder_scvi_forward.1} parent=5 // pred_region
      %s1730 = ssub.s32 %s16, 2
      // Predicated region
      $region65: #{decoder_scvi_forward.1} parent=63 // pred_check
        %p1731 = pneg %p186
      $region66: #{decoder_scvi_forward.1} parent=63 // pred_check_branch
        %1733 = sbr.rel (%p1731) target = $region68
      $region67: #{decoder_scvi_forward.1} parent=63 // pred_region
        %s1734 = smul.u32 13, %s22
        %p1735 = scmp.lt.s32.totalorder %s1734, 25
        %s1736 = scalar_select %p1735, %s1734, 25
        %s1737 = smul.addr %s1736, 2
        %s1738 = smul.addr %s1737, 8
        %s1739 = scalar_lea.vmem %s6, %s1738
      $region68: #{decoder_scvi_forward.1} parent=63 // pred_fallthru
        _
      // Predicated region
      $region69: #{decoder_scvi_forward.1} parent=63 // pred_check
        %p1740 = pneg %p212
      $region70: #{decoder_scvi_forward.1} parent=63 // pred_check_branch
        %1742 = sbr.rel (%p1740) target = $region72
      $region71: #{decoder_scvi_forward.1} parent=63 // pred_region
        %s1743 = smul.u32 13, %s22
        %p1744 = scmp.lt.s32.totalorder %s1743, 25
        %s1745 = scalar_select %p1744, %s1743, 25
        %s1746 = smul.addr %s1745, 2
        %s1747 = smul.addr %s1746, 8
        %s1748 = scalar_lea.vmem %s7, %s1747
      $region72: #{decoder_scvi_forward.1} parent=63 // pred_fallthru
        _
      // Predicated region
      $region73: #{decoder_scvi_forward.1} parent=63 // pred_check
        %p1749 = pneg %p238
      $region74: #{decoder_scvi_forward.1} parent=63 // pred_check_branch
        %1751 = sbr.rel (%p1749) target = $region76
      $region75: #{decoder_scvi_forward.1} parent=63 // pred_region
        %s1752 = smul.u32 13, %s22
        %p1753 = scmp.lt.s32.totalorder %s1752, 25
        %s1754 = scalar_select %p1753, %s1752, 25
        %s1755 = smul.addr %s1754, 2
        %s1756 = smul.addr %s1755, 8
        %s1757 = scalar_lea.vmem %s8, %s1756
      $region76: #{decoder_scvi_forward.1} parent=63 // pred_fallthru
        _
      // Predicated region
      $region77: #{decoder_scvi_forward.1} parent=63 // pred_check
        %p1758 = pneg %p264
      $region78: #{decoder_scvi_forward.1} parent=63 // pred_check_branch
        %1760 = sbr.rel (%p1758) target = $region80
      $region79: #{decoder_scvi_forward.1} parent=63 // pred_region
        %s1761 = smul.u32 13, %s22
        %p1762 = scmp.lt.s32.totalorder %s1761, 25
        %s1763 = scalar_select %p1762, %s1761, 25
        %s1764 = smul.addr %s1763, 2
        %s1765 = smul.addr %s1764, 8
        %s1766 = scalar_lea.vmem %s9, %s1765
      $region80: #{decoder_scvi_forward.1} parent=63 // pred_fallthru
        _
    $region64: #{decoder_scvi_forward.1} parent=5 // pred_fallthru
      _
  $region6: #{decoder_scvi_forward.1} parent=0 // loop_footer
    %s20 = sadd.s32 1, %s16
  $region7: #{decoder_scvi_forward.1} parent=0 // loop_footer_branch
    %15 = sbr.rel target = $region3
  $region8: #{decoder_scvi_forward.1} parent=0 // loop_exit
    _

</llo_original>
